<compile_context>
chip_gen: v7x
topology: tpu7x:2x2x1
jax: 0.10.0
libtpu: 0.0.40
codegen_flags: <defaults>
</compile_context>

<pallas_src>
import functools
import math

import jax
import jax.numpy as jnp
import numpy as np
from jax import lax
from jax.experimental import pallas as pl
from jax.experimental.pallas import tpu as pltpu

# Small synthetic configuration (module defaults are rand_features=513, out_samples=2000,
# latent_dim=6, out_dimensions=3, channels=[256, 512, 256]; sizes shrunk, structure kept).
B = 2                    # batch
F = 32                   # rand_features
S = 16                   # out_samples
L = 6                    # latent_dim
D = 3                    # out_dimensions
C0, C1, C2 = 32, 64, 32  # channels
EPS1 = 0.8               # BatchNorm2d(channels[0], eps=0.8)
EPS = 1e-5               # default BatchNorm eps
N_PIX = B * S * D        # total pixels
N_PAD = -(-N_PIX // 128) * 128   # lane-dense (multiple-of-128) padded output width


# ------------------------------- fused Pallas kernel --------------------------------

def _ccc_generator_kernel(noise_ref, wl_ref, bl_ref,
                          w1_ref, b1_ref, g1_ref, be1_ref,
                          w2_ref, b2_ref, g2_ref, be2_ref,
                          w3_ref, b3_ref, g3_ref, be3_ref,
                          w4_ref, b4_ref, o_ref):
    f32 = jnp.float32
    mm = functools.partial(jnp.dot, preferred_element_type=f32)   # default MXU precision

    def bn_relu(h, gamma, beta, eps):
        # h: (C, P) channels-in-rows. Training-mode batch stats per channel (per row),
        # one-pass (sum / sum-of-squares) in f32, variance clamped at 0 before rsqrt.
        inv_n = 1.0 / h.shape[1]
        mean = jnp.sum(h, axis=1, keepdims=True) * inv_n
        mean_sq = jnp.sum(h * h, axis=1, keepdims=True) * inv_n
        var = jnp.maximum(mean_sq - mean * mean, 0.0)
        scale = lax.rsqrt(var + eps) * gamma
        shift = beta - mean * scale
        return jnp.maximum(h * scale + shift, 0.0)

    noise = noise_ref[...]                                              # (B, F)

    # ---- nn.Linear(F -> S*L) + ReLU: ONE lane-dense matmul, columns ordered l*S + s ----
    lin = jnp.maximum(mm(noise, wl_ref[...]) + bl_ref[...], 0.0)        # (B, L*S)

    # ---- nn.Unflatten(1, (L, S, 1)) relayout: latent channels -> rows, pixels -> lanes ----
    # xT[l, b*S + s] = lin[b, l*S + s]; built from static slices + concats only (no eye
    # matmul, no reshapes).
    rows = []
    for l in range(L):
        rows.append(jnp.concatenate(
            [lin[b:b + 1, l * S:(l + 1) * S] for b in range(B)], axis=1))   # (1, B*S)
    xT = jnp.concatenate(rows, axis=0)                                  # (L, B*S)

    # ---- ConvTranspose2d(L, C0, kernel=(1, D)): one merged matmul over all D columns ----
    h1w = mm(w1_ref[...], xT)                                           # (D*C0, B*S)
    # merge the D output columns into the pixel (lane) axis -> pixels ordered (d, b, s)
    h = jnp.concatenate([h1w[d * C0:(d + 1) * C0, :] for d in range(D)], axis=1)  # (C0, N_PIX)
    h = bn_relu(h + b1_ref[...], g1_ref[...], be1_ref[...], EPS1)

    # ---- 1x1 ConvTranspose2d stacks: plain channel matmuls (weights packed (C_out, C_in)) ----
    h = bn_relu(mm(w2_ref[...], h) + b2_ref[...], g2_ref[...], be2_ref[...], EPS)   # (C1, N_PIX)
    h = bn_relu(mm(w3_ref[...], h) + b3_ref[...], g3_ref[...], be3_ref[...], EPS)   # (C2, N_PIX)

    # ---- ConvTranspose2d(C2, 1, 1x1) + Sigmoid, lane-dense padded (1, N_PAD) output ----
    logit = mm(w4_ref[...], h) + b4_ref[...]                            # (1, N_PIX)
    if N_PAD > N_PIX:
        logit = jnp.concatenate(
            [logit, jnp.zeros((1, N_PAD - N_PIX), f32)], axis=1)        # (1, N_PAD)
    o_ref[...] = pl.reciprocal(1.0 + jnp.exp(-logit), approx=True)      # sigmoid (EUP recip)


# ------------------------------- pallas_call glue ------------------------------------

_ARG_ORDER = ("wl", "bl", "w1", "b1", "g1", "be1",
              "w2", "b2", "g2", "be2", "w3", "b3", "g3", "be3", "w4", "b4")


def forward_pallas(noise, prep):
    args = (noise,) + tuple(prep[k] for k in _ARG_ORDER)
    vmem_spec = pl.BlockSpec(memory_space=pltpu.MemorySpace.VMEM)
    out = pl.pallas_call(
        _ccc_generator_kernel,
        out_shape=jax.ShapeDtypeStruct((1, N_PAD), jnp.float32),
        in_specs=[vmem_spec for _ in args],
        out_specs=vmem_spec,
    )(*args)
    # Kernel pixel lanes are ordered (d, b, s); restore the module's (B, S, D) layout.
    return out[:, :N_PIX].reshape(D, B, S).transpose(1, 2, 0)


def prepare_params(p):
    """One-time weight preprocessing, hoisted out of the per-forward path."""
    prep = {
        # Linear weight packed lane-dense: wl[f, l*S + s] = W[l*S + s, f].
        "wl": p["wl"].T,                                                  # (F, L*S)
        "bl": p["bl"].reshape(1, L * S),
        # ConvT(L, C0, (1, D)) weight packed with all D columns merged into the row axis:
        # w1[d*C0 + oc, l] = W1[l, oc, 0, d].
        "w1": jnp.transpose(p["w1"][:, :, 0, :], (2, 1, 0)).reshape(D * C0, L),
        "b1": p["b1"].reshape(C0, 1),
        "g1": p["g1"].reshape(C0, 1), "be1": p["be1"].reshape(C0, 1),
        # 1x1 ConvT weights packed (C_out, C_in) so every layer is a standard A @ B matmul.
        "w2": p["w2"][:, :, 0, 0].T, "b2": p["b2"].reshape(C1, 1),
        "g2": p["g2"].reshape(C1, 1), "be2": p["be2"].reshape(C1, 1),
        "w3": p["w3"][:, :, 0, 0].T, "b3": p["b3"].reshape(C2, 1),
        "g3": p["g3"].reshape(C2, 1), "be3": p["be3"].reshape(C2, 1),
        "w4": p["w4"][:, 0, 0, 0].reshape(1, C2), "b4": p["b4"].reshape(1, 1),
    }
    return jax.tree_util.tree_map(lambda a: jnp.asarray(a, jnp.float32), prep)


@jax.jit
def ccc_generator_forward(x, prepared, noise_key):
    # As in the PyTorch module, x is only used for its batch size; the torch.rand noise
    # source is replaced by a deterministic jax.random.uniform draw.
    batch = x.shape[0]
    noise = jax.random.uniform(noise_key, (batch, F), dtype=jnp.float32)
    return forward_pallas(noise, prepared)


# ------------------------------- pure-JAX reference ----------------------------------

def forward_reference(noise, p):
    lin = jnp.maximum(jnp.dot(noise, p["wl"].T) + p["bl"], 0.0)
    x = lin.reshape(B, L, S, 1)                                          # NCHW: (B, L, S, 1)

    def bn_train(h, gamma, beta, eps):
        mu = jnp.mean(h, axis=(0, 2, 3), keepdims=True)
        var = jnp.mean((h - mu) ** 2, axis=(0, 2, 3), keepdims=True)
        return (h - mu) * lax.rsqrt(var + eps) * gamma[None, :, None, None] \
            + beta[None, :, None, None]

    h = jnp.einsum("bcs,cow->bosw", x[..., 0], p["w1"][:, :, 0, :]) \
        + p["b1"][None, :, None, None]
    h = jnp.maximum(bn_train(h, p["g1"], p["be1"], EPS1), 0.0)
    h = jnp.einsum("bchw,co->bohw", h, p["w2"][:, :, 0, 0]) + p["b2"][None, :, None, None]
    h = jnp.maximum(bn_train(h, p["g2"], p["be2"], EPS), 0.0)
    h = jnp.einsum("bchw,co->bohw", h, p["w3"][:, :, 0, 0]) + p["b3"][None, :, None, None]
    h = jnp.maximum(bn_train(h, p["g3"], p["be3"], EPS), 0.0)
    h = jnp.einsum("bchw,co->bohw", h, p["w4"][:, :, 0, 0]) + p["b4"][None, :, None, None]
    h = h.reshape(B, S, D)                                               # Flatten(1, 2)
    return 1.0 / (1.0 + jnp.exp(-h))


# ------------------------------- parameter init --------------------------------------

def init_params(key):
    gain = math.sqrt(2.0)  # nn.init.calculate_gain('relu')

    def xavier(k, shape, fan_in, fan_out):
        lim = gain * math.sqrt(6.0 / (fan_in + fan_out))
        return jax.random.uniform(k, shape, jnp.float32, -lim, lim)

    ks = jax.random.split(key, 5)
    return {
        # nn.Linear(F, S*L): weight (out, in), bias filled with 0.01
        "wl": xavier(ks[0], (S * L, F), F, S * L),
        "bl": jnp.full((S * L,), 0.01, jnp.float32),
        # ConvTranspose2d weights: (in_ch, out_ch, kH, kW), biases = 0.01
        "w1": xavier(ks[1], (L, C0, 1, D), C0 * D, L * D),
        "b1": jnp.full((C0,), 0.01, jnp.float32),
        "w2": xavier(ks[2], (C0, C1, 1, 1), C1, C0),
        "b2": jnp.full((C1,), 0.01, jnp.float32),
        "w3": xavier(ks[3], (C1, C2, 1, 1), C2, C1),
        "b3": jnp.full((C2,), 0.01, jnp.float32),
        "w4": xavier(ks[4], (C2, 1, 1, 1), 1, C2),
        "b4": jnp.full((1,), 0.01, jnp.float32),
        # BatchNorm2d default affine init: weight=1, bias=0
        "g1": jnp.ones((C0,), jnp.float32), "be1": jnp.zeros((C0,), jnp.float32),
        "g2": jnp.ones((C1,), jnp.float32), "be2": jnp.zeros((C1,), jnp.float32),
        "g3": jnp.ones((C2,), jnp.float32), "be3": jnp.zeros((C2,), jnp.float32),
    }


if __name__ == "__main__":
    key = jax.random.PRNGKey(0)
    k_param, k_x, k_noise = jax.random.split(key, 3)

    params = init_params(k_param)
    prepared = prepare_params(params)   # one-time weight preprocessing

    # module input_shape = (out_samples, latent_dim)
    x = jax.random.normal(k_x, (B, S, L), dtype=jnp.float32)

    out = jax.block_until_ready(ccc_generator_forward(x, prepared, k_noise))
    assert out.shape == (B, S, D)

    # Sanity check against a pure-JAX reference with the same noise/params. Tolerance is
    # loosened vs. an exact-f32 check because both kernel and reference use default
    # (bf16-grade) MXU matmul precision with different op orderings.
    noise = jax.random.uniform(k_noise, (B, F), dtype=jnp.float32)
    ref = jax.block_until_ready(forward_reference(noise, params))
    if not np.allclose(np.asarray(out), np.asarray(ref), atol=2e-2, rtol=2e-2):
        raise AssertionError(
            f"mismatch: max abs diff = {np.max(np.abs(np.asarray(out) - np.asarray(ref)))}")

    print("KERNEL_OK")
</pallas_src>

<mosaic_0001>
module attributes {stable_mosaic.version = 11 : i64} {
  func.func @_ccc_generator_kernel(%arg0: memref<2x32xf32, #tpu.memory_space<vmem>>, %arg1: memref<32x96xf32, #tpu.memory_space<vmem>>, %arg2: memref<1x96xf32, #tpu.memory_space<vmem>>, %arg3: memref<96x6xf32, #tpu.memory_space<vmem>>, %arg4: memref<32x1xf32, #tpu.memory_space<vmem>>, %arg5: memref<32x1xf32, #tpu.memory_space<vmem>>, %arg6: memref<32x1xf32, #tpu.memory_space<vmem>>, %arg7: memref<64x32xf32, #tpu.memory_space<vmem>>, %arg8: memref<64x1xf32, #tpu.memory_space<vmem>>, %arg9: memref<64x1xf32, #tpu.memory_space<vmem>>, %arg10: memref<64x1xf32, #tpu.memory_space<vmem>>, %arg11: memref<32x64xf32, #tpu.memory_space<vmem>>, %arg12: memref<32x1xf32, #tpu.memory_space<vmem>>, %arg13: memref<32x1xf32, #tpu.memory_space<vmem>>, %arg14: memref<32x1xf32, #tpu.memory_space<vmem>>, %arg15: memref<1x32xf32, #tpu.memory_space<vmem>>, %arg16: memref<1x1xf32, #tpu.memory_space<vmem>>, %arg17: memref<1x128xf32, #tpu.memory_space<vmem>>) attributes {dimension_semantics = [], scalar_prefetch = 0 : i64, scratch_operands = 0 : i64, tpu.core_type = #tpu.core_type<tc>} {
    %c0 = arith.constant 0 : index
    %c0_0 = arith.constant 0 : index
    %0 = vector.load %arg0[%c0, %c0_0] : memref<2x32xf32, #tpu.memory_space<vmem>>, vector<2x32xf32>
    %c0_1 = arith.constant 0 : index
    %c0_2 = arith.constant 0 : index
    %1 = vector.load %arg1[%c0_1, %c0_2] : memref<32x96xf32, #tpu.memory_space<vmem>>, vector<32x96xf32>
    %cst = arith.constant dense<0.000000e+00> : vector<2x96xf32>
    %2 = tpu.matmul %0, %1, %cst {dimension_numbers = #tpu.dot_dimension_numbers<[1], [0], [0], [1], [0, 0, 1, 1], [], []>} : vector<2x32xf32>, vector<32x96xf32>, vector<2x96xf32> -> vector<2x96xf32>
    %c0_3 = arith.constant 0 : index
    %c0_4 = arith.constant 0 : index
    %3 = vector.load %arg2[%c0_3, %c0_4] : memref<1x96xf32, #tpu.memory_space<vmem>>, vector<1x96xf32>
    %4 = vector.broadcast %3 : vector<1x96xf32> to vector<2x96xf32>
    %5 = arith.addf %2, %4 : vector<2x96xf32>
    %cst_5 = arith.constant 0.000000e+00 : f32
    %6 = vector.broadcast %cst_5 : f32 to vector<2x96xf32>
    %7 = arith.maximumf %5, %6 : vector<2x96xf32>
    %8 = vector.extract_strided_slice %7 {offsets = [0, 0], sizes = [1, 16], strides = [1, 1]} : vector<2x96xf32> to vector<1x16xf32>
    %9 = vector.extract_strided_slice %7 {offsets = [1, 0], sizes = [1, 16], strides = [1, 1]} : vector<2x96xf32> to vector<1x16xf32>
    %10 = tpu.concatenate %8, %9 in 1 : vector<1x16xf32>, vector<1x16xf32> -> vector<1x32xf32>
    %11 = vector.extract_strided_slice %7 {offsets = [0, 16], sizes = [1, 16], strides = [1, 1]} : vector<2x96xf32> to vector<1x16xf32>
    %12 = vector.extract_strided_slice %7 {offsets = [1, 16], sizes = [1, 16], strides = [1, 1]} : vector<2x96xf32> to vector<1x16xf32>
    %13 = tpu.concatenate %11, %12 in 1 : vector<1x16xf32>, vector<1x16xf32> -> vector<1x32xf32>
    %14 = vector.extract_strided_slice %7 {offsets = [0, 32], sizes = [1, 16], strides = [1, 1]} : vector<2x96xf32> to vector<1x16xf32>
    %15 = vector.extract_strided_slice %7 {offsets = [1, 32], sizes = [1, 16], strides = [1, 1]} : vector<2x96xf32> to vector<1x16xf32>
    %16 = tpu.concatenate %14, %15 in 1 : vector<1x16xf32>, vector<1x16xf32> -> vector<1x32xf32>
    %17 = vector.extract_strided_slice %7 {offsets = [0, 48], sizes = [1, 16], strides = [1, 1]} : vector<2x96xf32> to vector<1x16xf32>
    %18 = vector.extract_strided_slice %7 {offsets = [1, 48], sizes = [1, 16], strides = [1, 1]} : vector<2x96xf32> to vector<1x16xf32>
    %19 = tpu.concatenate %17, %18 in 1 : vector<1x16xf32>, vector<1x16xf32> -> vector<1x32xf32>
    %20 = vector.extract_strided_slice %7 {offsets = [0, 64], sizes = [1, 16], strides = [1, 1]} : vector<2x96xf32> to vector<1x16xf32>
    %21 = vector.extract_strided_slice %7 {offsets = [1, 64], sizes = [1, 16], strides = [1, 1]} : vector<2x96xf32> to vector<1x16xf32>
    %22 = tpu.concatenate %20, %21 in 1 : vector<1x16xf32>, vector<1x16xf32> -> vector<1x32xf32>
    %23 = vector.extract_strided_slice %7 {offsets = [0, 80], sizes = [1, 16], strides = [1, 1]} : vector<2x96xf32> to vector<1x16xf32>
    %24 = vector.extract_strided_slice %7 {offsets = [1, 80], sizes = [1, 16], strides = [1, 1]} : vector<2x96xf32> to vector<1x16xf32>
    %25 = tpu.concatenate %23, %24 in 1 : vector<1x16xf32>, vector<1x16xf32> -> vector<1x32xf32>
    %26 = tpu.concatenate %10, %13, %16, %19, %22, %25 in 0 : vector<1x32xf32>, vector<1x32xf32>, vector<1x32xf32>, vector<1x32xf32>, vector<1x32xf32>, vector<1x32xf32> -> vector<6x32xf32>
    %c0_6 = arith.constant 0 : index
    %c0_7 = arith.constant 0 : index
    %27 = vector.load %arg3[%c0_6, %c0_7] : memref<96x6xf32, #tpu.memory_space<vmem>>, vector<96x6xf32>
    %cst_8 = arith.constant dense<0.000000e+00> : vector<96x32xf32>
    %28 = tpu.matmul %27, %26, %cst_8 {dimension_numbers = #tpu.dot_dimension_numbers<[1], [0], [0], [1], [0, 0, 1, 1], [], []>} : vector<96x6xf32>, vector<6x32xf32>, vector<96x32xf32> -> vector<96x32xf32>
    %29 = vector.extract_strided_slice %28 {offsets = [0, 0], sizes = [32, 32], strides = [1, 1]} : vector<96x32xf32> to vector<32x32xf32>
    %30 = vector.extract_strided_slice %28 {offsets = [32, 0], sizes = [32, 32], strides = [1, 1]} : vector<96x32xf32> to vector<32x32xf32>
    %31 = vector.extract_strided_slice %28 {offsets = [64, 0], sizes = [32, 32], strides = [1, 1]} : vector<96x32xf32> to vector<32x32xf32>
    %32 = tpu.concatenate %29, %30, %31 in 1 : vector<32x32xf32>, vector<32x32xf32>, vector<32x32xf32> -> vector<32x96xf32>
    %c0_9 = arith.constant 0 : index
    %c0_10 = arith.constant 0 : index
    %33 = vector.load %arg4[%c0_9, %c0_10] : memref<32x1xf32, #tpu.memory_space<vmem>>, vector<32x1xf32>
    %34 = vector.broadcast %33 : vector<32x1xf32> to vector<32x96xf32>
    %35 = arith.addf %32, %34 : vector<32x96xf32>
    %c0_11 = arith.constant 0 : index
    %c0_12 = arith.constant 0 : index
    %36 = vector.load %arg5[%c0_11, %c0_12] : memref<32x1xf32, #tpu.memory_space<vmem>>, vector<32x1xf32>
    %c0_13 = arith.constant 0 : index
    %c0_14 = arith.constant 0 : index
    %37 = vector.load %arg6[%c0_13, %c0_14] : memref<32x1xf32, #tpu.memory_space<vmem>>, vector<32x1xf32>
    %cst_15 = arith.constant dense<0.000000e+00> : vector<32xf32>
    %38 = vector.multi_reduction <add>, %35, %cst_15 [1] : vector<32x96xf32> to vector<32xf32>
    %39 = vector.shape_cast %38 : vector<32xf32> to vector<32x1xf32>
    %cst_16 = arith.constant 0.010416667 : f32
    %40 = vector.broadcast %cst_16 : f32 to vector<32x1xf32>
    %41 = arith.mulf %39, %40 : vector<32x1xf32>
    %42 = arith.mulf %35, %35 : vector<32x96xf32>
    %cst_17 = arith.constant dense<0.000000e+00> : vector<32xf32>
    %43 = vector.multi_reduction <add>, %42, %cst_17 [1] : vector<32x96xf32> to vector<32xf32>
    %44 = vector.shape_cast %43 : vector<32xf32> to vector<32x1xf32>
    %cst_18 = arith.constant 0.010416667 : f32
    %45 = vector.broadcast %cst_18 : f32 to vector<32x1xf32>
    %46 = arith.mulf %44, %45 : vector<32x1xf32>
    %47 = arith.mulf %41, %41 : vector<32x1xf32>
    %48 = arith.subf %46, %47 : vector<32x1xf32>
    %cst_19 = arith.constant 0.000000e+00 : f32
    %49 = vector.broadcast %cst_19 : f32 to vector<32x1xf32>
    %50 = arith.maximumf %48, %49 : vector<32x1xf32>
    %cst_20 = arith.constant 8.000000e-01 : f32
    %51 = vector.broadcast %cst_20 : f32 to vector<32x1xf32>
    %52 = arith.addf %50, %51 : vector<32x1xf32>
    %53 = math.rsqrt %52 : vector<32x1xf32>
    %54 = arith.mulf %53, %36 : vector<32x1xf32>
    %55 = arith.mulf %41, %54 : vector<32x1xf32>
    %56 = arith.subf %37, %55 : vector<32x1xf32>
    %57 = vector.broadcast %54 : vector<32x1xf32> to vector<32x96xf32>
    %58 = arith.mulf %35, %57 : vector<32x96xf32>
    %59 = vector.broadcast %56 : vector<32x1xf32> to vector<32x96xf32>
    %60 = arith.addf %58, %59 : vector<32x96xf32>
    %cst_21 = arith.constant 0.000000e+00 : f32
    %61 = vector.broadcast %cst_21 : f32 to vector<32x96xf32>
    %62 = arith.maximumf %60, %61 : vector<32x96xf32>
    %c0_22 = arith.constant 0 : index
    %c0_23 = arith.constant 0 : index
    %63 = vector.load %arg7[%c0_22, %c0_23] : memref<64x32xf32, #tpu.memory_space<vmem>>, vector<64x32xf32>
    %cst_24 = arith.constant dense<0.000000e+00> : vector<64x96xf32>
    %64 = tpu.matmul %63, %62, %cst_24 {dimension_numbers = #tpu.dot_dimension_numbers<[1], [0], [0], [1], [0, 0, 1, 1], [], []>} : vector<64x32xf32>, vector<32x96xf32>, vector<64x96xf32> -> vector<64x96xf32>
    %c0_25 = arith.constant 0 : index
    %c0_26 = arith.constant 0 : index
    %65 = vector.load %arg8[%c0_25, %c0_26] : memref<64x1xf32, #tpu.memory_space<vmem>>, vector<64x1xf32>
    %66 = vector.broadcast %65 : vector<64x1xf32> to vector<64x96xf32>
    %67 = arith.addf %64, %66 : vector<64x96xf32>
    %c0_27 = arith.constant 0 : index
    %c0_28 = arith.constant 0 : index
    %68 = vector.load %arg9[%c0_27, %c0_28] : memref<64x1xf32, #tpu.memory_space<vmem>>, vector<64x1xf32>
    %c0_29 = arith.constant 0 : index
    %c0_30 = arith.constant 0 : index
    %69 = vector.load %arg10[%c0_29, %c0_30] : memref<64x1xf32, #tpu.memory_space<vmem>>, vector<64x1xf32>
    %cst_31 = arith.constant dense<0.000000e+00> : vector<64xf32>
    %70 = vector.multi_reduction <add>, %67, %cst_31 [1] : vector<64x96xf32> to vector<64xf32>
    %71 = vector.shape_cast %70 : vector<64xf32> to vector<64x1xf32>
    %cst_32 = arith.constant 0.010416667 : f32
    %72 = vector.broadcast %cst_32 : f32 to vector<64x1xf32>
    %73 = arith.mulf %71, %72 : vector<64x1xf32>
    %74 = arith.mulf %67, %67 : vector<64x96xf32>
    %cst_33 = arith.constant dense<0.000000e+00> : vector<64xf32>
    %75 = vector.multi_reduction <add>, %74, %cst_33 [1] : vector<64x96xf32> to vector<64xf32>
    %76 = vector.shape_cast %75 : vector<64xf32> to vector<64x1xf32>
    %cst_34 = arith.constant 0.010416667 : f32
    %77 = vector.broadcast %cst_34 : f32 to vector<64x1xf32>
    %78 = arith.mulf %76, %77 : vector<64x1xf32>
    %79 = arith.mulf %73, %73 : vector<64x1xf32>
    %80 = arith.subf %78, %79 : vector<64x1xf32>
    %cst_35 = arith.constant 0.000000e+00 : f32
    %81 = vector.broadcast %cst_35 : f32 to vector<64x1xf32>
    %82 = arith.maximumf %80, %81 : vector<64x1xf32>
    %cst_36 = arith.constant 9.99999974E-6 : f32
    %83 = vector.broadcast %cst_36 : f32 to vector<64x1xf32>
    %84 = arith.addf %82, %83 : vector<64x1xf32>
    %85 = math.rsqrt %84 : vector<64x1xf32>
    %86 = arith.mulf %85, %68 : vector<64x1xf32>
    %87 = arith.mulf %73, %86 : vector<64x1xf32>
    %88 = arith.subf %69, %87 : vector<64x1xf32>
    %89 = vector.broadcast %86 : vector<64x1xf32> to vector<64x96xf32>
    %90 = arith.mulf %67, %89 : vector<64x96xf32>
    %91 = vector.broadcast %88 : vector<64x1xf32> to vector<64x96xf32>
    %92 = arith.addf %90, %91 : vector<64x96xf32>
    %cst_37 = arith.constant 0.000000e+00 : f32
    %93 = vector.broadcast %cst_37 : f32 to vector<64x96xf32>
    %94 = arith.maximumf %92, %93 : vector<64x96xf32>
    %c0_38 = arith.constant 0 : index
    %c0_39 = arith.constant 0 : index
    %95 = vector.load %arg11[%c0_38, %c0_39] : memref<32x64xf32, #tpu.memory_space<vmem>>, vector<32x64xf32>
    %cst_40 = arith.constant dense<0.000000e+00> : vector<32x96xf32>
    %96 = tpu.matmul %95, %94, %cst_40 {dimension_numbers = #tpu.dot_dimension_numbers<[1], [0], [0], [1], [0, 0, 1, 1], [], []>} : vector<32x64xf32>, vector<64x96xf32>, vector<32x96xf32> -> vector<32x96xf32>
    %c0_41 = arith.constant 0 : index
    %c0_42 = arith.constant 0 : index
    %97 = vector.load %arg12[%c0_41, %c0_42] : memref<32x1xf32, #tpu.memory_space<vmem>>, vector<32x1xf32>
    %98 = vector.broadcast %97 : vector<32x1xf32> to vector<32x96xf32>
    %99 = arith.addf %96, %98 : vector<32x96xf32>
    %c0_43 = arith.constant 0 : index
    %c0_44 = arith.constant 0 : index
    %100 = vector.load %arg13[%c0_43, %c0_44] : memref<32x1xf32, #tpu.memory_space<vmem>>, vector<32x1xf32>
    %c0_45 = arith.constant 0 : index
    %c0_46 = arith.constant 0 : index
    %101 = vector.load %arg14[%c0_45, %c0_46] : memref<32x1xf32, #tpu.memory_space<vmem>>, vector<32x1xf32>
    %cst_47 = arith.constant dense<0.000000e+00> : vector<32xf32>
    %102 = vector.multi_reduction <add>, %99, %cst_47 [1] : vector<32x96xf32> to vector<32xf32>
    %103 = vector.shape_cast %102 : vector<32xf32> to vector<32x1xf32>
    %cst_48 = arith.constant 0.010416667 : f32
    %104 = vector.broadcast %cst_48 : f32 to vector<32x1xf32>
    %105 = arith.mulf %103, %104 : vector<32x1xf32>
    %106 = arith.mulf %99, %99 : vector<32x96xf32>
    %cst_49 = arith.constant dense<0.000000e+00> : vector<32xf32>
    %107 = vector.multi_reduction <add>, %106, %cst_49 [1] : vector<32x96xf32> to vector<32xf32>
    %108 = vector.shape_cast %107 : vector<32xf32> to vector<32x1xf32>
    %cst_50 = arith.constant 0.010416667 : f32
    %109 = vector.broadcast %cst_50 : f32 to vector<32x1xf32>
    %110 = arith.mulf %108, %109 : vector<32x1xf32>
    %111 = arith.mulf %105, %105 : vector<32x1xf32>
    %112 = arith.subf %110, %111 : vector<32x1xf32>
    %cst_51 = arith.constant 0.000000e+00 : f32
    %113 = vector.broadcast %cst_51 : f32 to vector<32x1xf32>
    %114 = arith.maximumf %112, %113 : vector<32x1xf32>
    %cst_52 = arith.constant 9.99999974E-6 : f32
    %115 = vector.broadcast %cst_52 : f32 to vector<32x1xf32>
    %116 = arith.addf %114, %115 : vector<32x1xf32>
    %117 = math.rsqrt %116 : vector<32x1xf32>
    %118 = arith.mulf %117, %100 : vector<32x1xf32>
    %119 = arith.mulf %105, %118 : vector<32x1xf32>
    %120 = arith.subf %101, %119 : vector<32x1xf32>
    %121 = vector.broadcast %118 : vector<32x1xf32> to vector<32x96xf32>
    %122 = arith.mulf %99, %121 : vector<32x96xf32>
    %123 = vector.broadcast %120 : vector<32x1xf32> to vector<32x96xf32>
    %124 = arith.addf %122, %123 : vector<32x96xf32>
    %cst_53 = arith.constant 0.000000e+00 : f32
    %125 = vector.broadcast %cst_53 : f32 to vector<32x96xf32>
    %126 = arith.maximumf %124, %125 : vector<32x96xf32>
    %c0_54 = arith.constant 0 : index
    %c0_55 = arith.constant 0 : index
    %127 = vector.load %arg15[%c0_54, %c0_55] : memref<1x32xf32, #tpu.memory_space<vmem>>, vector<1x32xf32>
    %cst_56 = arith.constant dense<0.000000e+00> : vector<1x96xf32>
    %128 = tpu.matmul %127, %126, %cst_56 {dimension_numbers = #tpu.dot_dimension_numbers<[1], [0], [0], [1], [0, 0, 1, 1], [], []>} : vector<1x32xf32>, vector<32x96xf32>, vector<1x96xf32> -> vector<1x96xf32>
    %c0_57 = arith.constant 0 : index
    %c0_58 = arith.constant 0 : index
    %129 = vector.load %arg16[%c0_57, %c0_58] : memref<1x1xf32, #tpu.memory_space<vmem>>, vector<1x1xf32>
    %130 = vector.broadcast %129 : vector<1x1xf32> to vector<1x96xf32>
    %131 = arith.addf %128, %130 : vector<1x96xf32>
    %cst_59 = arith.constant 0.000000e+00 : f32
    %132 = vector.broadcast %cst_59 : f32 to vector<1x32xf32>
    %133 = tpu.concatenate %131, %132 in 1 : vector<1x96xf32>, vector<1x32xf32> -> vector<1x128xf32>
    %cst_60 = arith.constant 0.000000e+00 : f32
    %134 = vector.broadcast %cst_60 : f32 to vector<1x128xf32>
    %135 = arith.subf %134, %133 : vector<1x128xf32>
    %136 = math.exp %135 : vector<1x128xf32>
    %cst_61 = arith.constant 1.000000e+00 : f32
    %137 = vector.broadcast %cst_61 : f32 to vector<1x128xf32>
    %138 = arith.addf %137, %136 : vector<1x128xf32>
    %139 = tpu.reciprocal %138 {approx = true} : vector<1x128xf32> -> vector<1x128xf32>
    %c0_62 = arith.constant 0 : index
    %c0_63 = arith.constant 0 : index
    %140 = vector.load %arg17[%c0_62, %c0_63] : memref<1x128xf32, #tpu.memory_space<vmem>>, vector<1x128xf32>
    tpu.vector_store %arg17[%c0_62, %c0_63], %139 {strides = array<i32>} : memref<1x128xf32, #tpu.memory_space<vmem>>, vector<1x128xf32>,
    return
  }
}

</mosaic_0001>

<llo_original>
// kernel: ccc_generator_forward.1
$region0: #{ccc_generator_forward.1}
  #allocation0 [shape = 'u32[]', space=smem, size = 0x4, offset = 0x4, fixed_abs, tag = 'smem constant byte address 0x4 - core index']
  #allocation1 [shape = 'u32[144,128]{1,0:T(1,128)}', space=vmem, size = 0x12000, scoped, tag = 'internal scratch']
  #allocation2 [shape = 'f32[1,1]{1,0:T(1,128)S(1)}', space=vmem, size = 0x200, scoped, tag = 'scoped memory for ccc_generator_forward.1']
  %s0 = inlined_call_operand.vmem [shape: f32[2,32], index: 0, kind: input, shape index: {}]
  %s1 = inlined_call_operand.vmem [shape: f32[32,96], index: 1, kind: input, shape index: {}]
  %s2 = inlined_call_operand.vmem [shape: f32[1,96], index: 2, kind: input, shape index: {}]
  %s3 = inlined_call_operand.vmem [shape: f32[96,6], index: 3, kind: input, shape index: {}]
  %s4 = inlined_call_operand.vmem [shape: f32[32,1], index: 4, kind: input, shape index: {}]
  %s5 = inlined_call_operand.vmem [shape: f32[32,1], index: 5, kind: input, shape index: {}]
  %s6 = inlined_call_operand.vmem [shape: f32[32,1], index: 6, kind: input, shape index: {}]
  %s7 = inlined_call_operand.vmem [shape: f32[64,32], index: 7, kind: input, shape index: {}]
  %s8 = inlined_call_operand.vmem [shape: f32[64,1], index: 8, kind: input, shape index: {}]
  %s9 = inlined_call_operand.vmem [shape: f32[64,1], index: 9, kind: input, shape index: {}]
  %s10 = inlined_call_operand.vmem [shape: f32[64,1], index: 10, kind: input, shape index: {}]
  %s11 = inlined_call_operand.vmem [shape: f32[32,64], index: 11, kind: input, shape index: {}]
  %s12 = inlined_call_operand.vmem [shape: f32[32,1], index: 12, kind: input, shape index: {}]
  %s13 = inlined_call_operand.vmem [shape: f32[32,1], index: 13, kind: input, shape index: {}]
  %s14 = inlined_call_operand.vmem [shape: f32[32,1], index: 14, kind: input, shape index: {}]
  %s15 = inlined_call_operand.vmem [shape: f32[1,32], index: 15, kind: input, shape index: {}]
  %s16 = inlined_call_operand.<no memory space> [shape: f32[1,1], index: 16, kind: input, shape index: {}]
  %s17 = inlined_call_operand.vmem [shape: f32[1,128], index: 17, kind: output, shape index: {}]
  %s18 = sld [smem:[#allocation0]]
  $region78: #{ccc_generator_forward.1} parent=0
    _
  %s20 = ssub.s32 1, %s18
  %s21 = scalar_select 0, %s20, %s18
  %v22 = vstv %s16
  %23 = vst [vmem:[#allocation2] sm:$0x1] %v22
  // Predicated region
  $region2: #{ccc_generator_forward.1} parent=0 // pred_check
    _
  $region3: #{ccc_generator_forward.1} parent=0 // pred_check_branch
    %25 = sbr.rel (0) target = $region5
  $region4: #{ccc_generator_forward.1} parent=0 // pred_region
    _
  $region5: #{ccc_generator_forward.1} parent=0 // pred_fallthru
    _
  // Predicated region
  $region6: #{ccc_generator_forward.1} parent=0 // pred_check
    _
  $region7: #{ccc_generator_forward.1} parent=0 // pred_check_branch
    %27 = sbr.rel (0) target = $region9
  $region8: #{ccc_generator_forward.1} parent=0 // pred_region
    _
  $region9: #{ccc_generator_forward.1} parent=0 // pred_fallthru
    _
  // Predicated region
  $region10: #{ccc_generator_forward.1} parent=0 // pred_check
    _
  $region11: #{ccc_generator_forward.1} parent=0 // pred_check_branch
    %29 = sbr.rel (0) target = $region13
  $region12: #{ccc_generator_forward.1} parent=0 // pred_region
    _
  $region13: #{ccc_generator_forward.1} parent=0 // pred_fallthru
    _
  // Predicated region
  $region14: #{ccc_generator_forward.1} parent=0 // pred_check
    _
  $region15: #{ccc_generator_forward.1} parent=0 // pred_check_branch
    %31 = sbr.rel (0) target = $region17
  $region16: #{ccc_generator_forward.1} parent=0 // pred_region
    _
  $region17: #{ccc_generator_forward.1} parent=0 // pred_fallthru
    _
  // Predicated region
  $region18: #{ccc_generator_forward.1} parent=0 // pred_check
    _
  $region19: #{ccc_generator_forward.1} parent=0 // pred_check_branch
    %33 = sbr.rel (0) target = $region21
  $region20: #{ccc_generator_forward.1} parent=0 // pred_region
    _
  $region21: #{ccc_generator_forward.1} parent=0 // pred_fallthru
    _
  // Predicated region
  $region22: #{ccc_generator_forward.1} parent=0 // pred_check
    _
  $region23: #{ccc_generator_forward.1} parent=0 // pred_check_branch
    %35 = sbr.rel (0) target = $region25
  $region24: #{ccc_generator_forward.1} parent=0 // pred_region
    _
  $region25: #{ccc_generator_forward.1} parent=0 // pred_fallthru
    _
  // Predicated region
  $region26: #{ccc_generator_forward.1} parent=0 // pred_check
    _
  $region27: #{ccc_generator_forward.1} parent=0 // pred_check_branch
    %37 = sbr.rel (0) target = $region29
  $region28: #{ccc_generator_forward.1} parent=0 // pred_region
    _
  $region29: #{ccc_generator_forward.1} parent=0 // pred_fallthru
    _
  // Predicated region
  $region30: #{ccc_generator_forward.1} parent=0 // pred_check
    _
  $region31: #{ccc_generator_forward.1} parent=0 // pred_check_branch
    %39 = sbr.rel (0) target = $region33
  $region32: #{ccc_generator_forward.1} parent=0 // pred_region
    _
  $region33: #{ccc_generator_forward.1} parent=0 // pred_fallthru
    _
  // Predicated region
  $region34: #{ccc_generator_forward.1} parent=0 // pred_check
    _
  $region35: #{ccc_generator_forward.1} parent=0 // pred_check_branch
    %41 = sbr.rel (0) target = $region37
  $region36: #{ccc_generator_forward.1} parent=0 // pred_region
    _
  $region37: #{ccc_generator_forward.1} parent=0 // pred_fallthru
    _
  // Predicated region
  $region38: #{ccc_generator_forward.1} parent=0 // pred_check
    _
  $region39: #{ccc_generator_forward.1} parent=0 // pred_check_branch
    %43 = sbr.rel (0) target = $region41
  $region40: #{ccc_generator_forward.1} parent=0 // pred_region
    _
  $region41: #{ccc_generator_forward.1} parent=0 // pred_fallthru
    _
  // Predicated region
  $region42: #{ccc_generator_forward.1} parent=0 // pred_check
    _
  $region43: #{ccc_generator_forward.1} parent=0 // pred_check_branch
    %45 = sbr.rel (0) target = $region45
  $region44: #{ccc_generator_forward.1} parent=0 // pred_region
    _
  $region45: #{ccc_generator_forward.1} parent=0 // pred_fallthru
    _
  // Predicated region
  $region46: #{ccc_generator_forward.1} parent=0 // pred_check
    _
  $region47: #{ccc_generator_forward.1} parent=0 // pred_check_branch
    %47 = sbr.rel (0) target = $region49
  $region48: #{ccc_generator_forward.1} parent=0 // pred_region
    _
  $region49: #{ccc_generator_forward.1} parent=0 // pred_fallthru
    _
  // Predicated region
  $region50: #{ccc_generator_forward.1} parent=0 // pred_check
    _
  $region51: #{ccc_generator_forward.1} parent=0 // pred_check_branch
    %49 = sbr.rel (0) target = $region53
  $region52: #{ccc_generator_forward.1} parent=0 // pred_region
    _
  $region53: #{ccc_generator_forward.1} parent=0 // pred_fallthru
    _
  // Predicated region
  $region54: #{ccc_generator_forward.1} parent=0 // pred_check
    _
  $region55: #{ccc_generator_forward.1} parent=0 // pred_check_branch
    %51 = sbr.rel (0) target = $region57
  $region56: #{ccc_generator_forward.1} parent=0 // pred_region
    _
  $region57: #{ccc_generator_forward.1} parent=0 // pred_fallthru
    _
  // Predicated region
  $region58: #{ccc_generator_forward.1} parent=0 // pred_check
    _
  $region59: #{ccc_generator_forward.1} parent=0 // pred_check_branch
    %53 = sbr.rel (0) target = $region61
  $region60: #{ccc_generator_forward.1} parent=0 // pred_region
    _
  $region61: #{ccc_generator_forward.1} parent=0 // pred_fallthru
    _
  // Predicated region
  $region62: #{ccc_generator_forward.1} parent=0 // pred_check
    _
  $region63: #{ccc_generator_forward.1} parent=0 // pred_check_branch
    %55 = sbr.rel (0) target = $region65
  $region64: #{ccc_generator_forward.1} parent=0 // pred_region
    _
  $region65: #{ccc_generator_forward.1} parent=0 // pred_fallthru
    _
  // Predicated region
  $region66: #{ccc_generator_forward.1} parent=0 // pred_check
    _
  $region67: #{ccc_generator_forward.1} parent=0 // pred_check_branch
    %57 = sbr.rel (0) target = $region69
  $region68: #{ccc_generator_forward.1} parent=0 // pred_region
    _
  $region69: #{ccc_generator_forward.1} parent=0 // pred_fallthru
    _
  %v58 = vld [vmem:[%s0] sm:$0x3]
  %v59 = vld [vmem:[%s1] sm:$0xff]
  %v60 = vld [vmem:[%s1 + $0x8] sm:$0xff]
  %v61 = vld [vmem:[%s1 + $0x10] sm:$0xff]
  %v62 = vld [vmem:[%s1 + $0x18] sm:$0xff]
  %v63 = vld [vmem:[%s2] sm:$0x1]
  %v65 = vlaneseq
  %v66 = vshrl.u32 %v65, 7
  %v67 = vsub.s32 0, %v66
  %v68 = vrot.slane %v63, %v67
  %vm70 = vcmask 261120
  %v72 = vsel %vm70, %v58, 0
  %74 = vmatprep.subr.mxu0 0.0
  %75 = vmatpush1.msra.mxu0 %v59
  %76 = vmatprep.subr.mxu0 0.0
  %77 = vmatpush1.msra.mxu0 %v60
  %78 = vmatprep.subr.mxu0 0.0
  %79 = vmatpush1.msra.mxu0 %v61
  %80 = vmatprep.subr.mxu0 0.0
  %81 = vmatpush1.msra.mxu0 %v62
  %82 = vmatprep.subr.mxu0 0.0
  %83 = vmatpush1.msra.mxu0 0.0
  %84 = vmatprep.subr.mxu0 0.0
  %85 = vmatpush1.msra.mxu0 0.0
  %86 = vmatprep.subr.mxu0 0.0
  %87 = vmatpush1.msra.mxu0 0.0
  %88 = vmatprep.subr.mxu0 0.0
  %89 = vmatpush1.msra.mxu0 0.0
  %90 = vmatprep.subr.mxu0 0.0
  %91 = vmatpush1.msra.mxu0 0.0
  %92 = vmatprep.subr.mxu0 0.0
  %93 = vmatpush1.msra.mxu0 0.0
  %94 = vmatprep.subr.mxu0 0.0
  %95 = vmatpush1.msra.mxu0 0.0
  %96 = vmatprep.subr.mxu0 0.0
  %97 = vmatpush1.msra.mxu0 0.0
  %98 = vmatprep.subr.mxu0 0.0
  %99 = vmatpush1.msra.mxu0 0.0
  %100 = vmatprep.subr.mxu0 0.0
  %101 = vmatpush1.msra.mxu0 0.0
  %102 = vmatprep.subr.mxu0 0.0
  %103 = vmatpush1.msra.mxu0 0.0
  %104 = vmatprep.subr.mxu0 0.0
  %105 = vmatpush1.msra.mxu0 0.0
  %106 = vmatprep.subr.mxu0 0.0
  %107 = vmatpush1.msra.mxu0 0.0
  %108 = vmatprep.subr.mxu0 0.0
  %109 = vmatpush1.msra.mxu0 0.0
  %110 = vmatprep.subr.mxu0 0.0
  %111 = vmatpush1.msra.mxu0 0.0
  %112 = vmatprep.subr.mxu0 0.0
  %113 = vmatpush1.msra.mxu0 0.0
  %114 = vmatprep.subr.mxu0 0.0
  %115 = vmatpush1.msra.mxu0 0.0
  %116 = vmatprep.subr.mxu0 0.0
  %117 = vmatpush1.msra.mxu0 0.0
  %118 = vmatprep.subr.mxu0 0.0
  %119 = vmatpush1.msra.mxu0 0.0
  %120 = vmatprep.subr.mxu0 0.0
  %121 = vmatpush1.msra.mxu0 0.0
  %122 = vmatprep.subr.mxu0 0.0
  %123 = vmatpush1.msra.mxu0 0.0
  %124 = vmatprep.subr.mxu0 0.0
  %125 = vmatpush1.msra.mxu0 0.0
  %126 = vmatprep.subr.mxu0 0.0
  %127 = vmatpush1.msra.mxu0 0.0
  %128 = vmatprep.subr.mxu0 0.0
  %129 = vmatpush1.msra.mxu0 0.0
  %130 = vmatprep.subr.mxu0 0.0
  %131 = vmatpush1.msra.mxu0 0.0
  %132 = vmatprep.subr.mxu0 0.0
  %133 = vmatpush1.msra.mxu0 0.0
  %134 = vmatprep.subr.mxu0 0.0
  %135 = vmatpush1.msra.mxu0 0.0
  %136 = vmatprep.subr.mxu0 0.0
  %137 = vmatpush1.msra.mxu0 0.0
  %138 = vmatprep.mubr.f32.mxu0 0.0
  %139 = vmatmul.mubr.f32.gmra.mrb[0].mxu0 %v72
  %v140 = vpop.f32.mrb[0].mxu0
  %v141 = vadd.f32 %v68, %v140
  %v142 = vpop.f32.mrb[0].mxu0
  %143 = vdwg.mxu0
  %v144 = vmax.f32 %v141, 0.0
  %v146 = vrot.slane %v144, 1
  %147 = vrot.lane.b32.xlu0 %v146, 16
  %v148 = vpop.permute.xlu0 %147
  %vm150 = vcmask 130048
  %v151 = vsel %vm150, %v144, %v148
  %152 = vrot.lane.b32.xlu0 %v144, 112
  %v153 = vpop.permute.xlu0 %152
  %v156 = vsel %vm150, %v153, %v146
  %157 = vrot.lane.b32.xlu0 %v144, 96
  %v158 = vpop.permute.xlu0 %157
  %160 = vrot.lane.b32.xlu0 %v146, 112
  %v161 = vpop.permute.xlu0 %160
  %v163 = vsel %vm150, %v158, %v161
  %164 = vrot.lane.b32.xlu0 %v144, 80
  %v165 = vpop.permute.xlu0 %164
  %167 = vrot.lane.b32.xlu0 %v146, 96
  %v168 = vpop.permute.xlu0 %167
  %v170 = vsel %vm150, %v165, %v168
  %171 = vrot.lane.b32.xlu0 %v144, 64
  %v172 = vpop.permute.xlu0 %171
  %174 = vrot.lane.b32.xlu0 %v146, 80
  %v175 = vpop.permute.xlu0 %174
  %v177 = vsel %vm150, %v172, %v175
  %178 = vrot.lane.b32.xlu0 %v144, 48
  %v179 = vpop.permute.xlu0 %178
  %181 = vrot.lane.b32.xlu0 %v146, 64
  %v182 = vpop.permute.xlu0 %181
  %v184 = vsel %vm150, %v179, %v182
  %v186 = vrot.slane %v156, 7
  %v189 = vrot.slane %v163, 6
  %v192 = vrot.slane %v170, 5
  %v195 = vrot.slane %v177, 4
  %v198 = vrot.slane %v184, 3
  %vm200 = vcmask 1040384
  %v201 = vsel %vm200, %v151, %v186
  %vm202 = vcmask 1041408
  %v203 = vsel %vm202, %v201, %v189
  %vm204 = vcmask 1042432
  %v205 = vsel %vm204, %v203, %v192
  %vm206 = vcmask 1043456
  %v207 = vsel %vm206, %v205, %v195
  %vm208 = vcmask 1044480
  %v209 = vsel %vm208, %v207, %v198
  %v210 = vld [vmem:[%s3] sm:$0xff]
  %v211 = vld [vmem:[%s3 + $0x8] sm:$0xff]
  %v212 = vld [vmem:[%s3 + $0x10] sm:$0xff]
  %v213 = vld [vmem:[%s3 + $0x18] sm:$0xff]
  %v214 = vld [vmem:[%s3 + $0x20] sm:$0xff]
  %v215 = vld [vmem:[%s3 + $0x28] sm:$0xff]
  %v216 = vld [vmem:[%s3 + $0x30] sm:$0xff]
  %v217 = vld [vmem:[%s3 + $0x38] sm:$0xff]
  %v218 = vld [vmem:[%s3 + $0x40] sm:$0xff]
  %v219 = vld [vmem:[%s3 + $0x48] sm:$0xff]
  %v220 = vld [vmem:[%s3 + $0x50] sm:$0xff]
  %v221 = vld [vmem:[%s3 + $0x58] sm:$0xff]
  %vm222 = vcmask 48128
  %v224 = vsel %vm222, %v210, 0
  %v227 = vsel %vm222, %v211, 0
  %v230 = vsel %vm222, %v212, 0
  %v233 = vsel %vm222, %v213, 0
  %v236 = vsel %vm222, %v214, 0
  %v239 = vsel %vm222, %v215, 0
  %v242 = vsel %vm222, %v216, 0
  %v245 = vsel %vm222, %v217, 0
  %v248 = vsel %vm222, %v218, 0
  %v251 = vsel %vm222, %v219, 0
  %v254 = vsel %vm222, %v220, 0
  %v257 = vsel %vm222, %v221, 0
  %vm259 = vcmask 1045504
  %v261 = vsel %vm259, %v209, 0
  %263 = vmatprep.subr.mxu0 0.0
  %264 = vmatpush1.msra.mxu0 %v261
  %265 = vmatprep.subr.mxu0 0.0
  %266 = vmatpush1.msra.mxu0 0.0
  %267 = vmatprep.subr.mxu0 0.0
  %268 = vmatpush1.msra.mxu0 0.0
  %269 = vmatprep.subr.mxu0 0.0
  %270 = vmatpush1.msra.mxu0 0.0
  %271 = vmatprep.subr.mxu0 0.0
  %272 = vmatpush1.msra.mxu0 0.0
  %273 = vmatprep.subr.mxu0 0.0
  %274 = vmatpush1.msra.mxu0 0.0
  %275 = vmatprep.subr.mxu0 0.0
  %276 = vmatpush1.msra.mxu0 0.0
  %277 = vmatprep.subr.mxu0 0.0
  %278 = vmatpush1.msra.mxu0 0.0
  %279 = vmatprep.subr.mxu0 0.0
  %280 = vmatpush1.msra.mxu0 0.0
  %281 = vmatprep.subr.mxu0 0.0
  %282 = vmatpush1.msra.mxu0 0.0
  %283 = vmatprep.subr.mxu0 0.0
  %284 = vmatpush1.msra.mxu0 0.0
  %285 = vmatprep.subr.mxu0 0.0
  %286 = vmatpush1.msra.mxu0 0.0
  %287 = vmatprep.subr.mxu0 0.0
  %288 = vmatpush1.msra.mxu0 0.0
  %289 = vmatprep.subr.mxu0 0.0
  %290 = vmatpush1.msra.mxu0 0.0
  %291 = vmatprep.subr.mxu0 0.0
  %292 = vmatpush1.msra.mxu0 0.0
  %293 = vmatprep.subr.mxu0 0.0
  %294 = vmatpush1.msra.mxu0 0.0
  %295 = vmatprep.subr.mxu0 0.0
  %296 = vmatpush1.msra.mxu0 0.0
  %297 = vmatprep.subr.mxu0 0.0
  %298 = vmatpush1.msra.mxu0 0.0
  %299 = vmatprep.subr.mxu0 0.0
  %300 = vmatpush1.msra.mxu0 0.0
  %301 = vmatprep.subr.mxu0 0.0
  %302 = vmatpush1.msra.mxu0 0.0
  %303 = vmatprep.subr.mxu0 0.0
  %304 = vmatpush1.msra.mxu0 0.0
  %305 = vmatprep.subr.mxu0 0.0
  %306 = vmatpush1.msra.mxu0 0.0
  %307 = vmatprep.subr.mxu0 0.0
  %308 = vmatpush1.msra.mxu0 0.0
  %309 = vmatprep.subr.mxu0 0.0
  %310 = vmatpush1.msra.mxu0 0.0
  %311 = vmatprep.subr.mxu0 0.0
  %312 = vmatpush1.msra.mxu0 0.0
  %313 = vmatprep.subr.mxu0 0.0
  %314 = vmatpush1.msra.mxu0 0.0
  %315 = vmatprep.subr.mxu0 0.0
  %316 = vmatpush1.msra.mxu0 0.0
  %317 = vmatprep.subr.mxu0 0.0
  %318 = vmatpush1.msra.mxu0 0.0
  %319 = vmatprep.subr.mxu0 0.0
  %320 = vmatpush1.msra.mxu0 0.0
  %321 = vmatprep.subr.mxu0 0.0
  %322 = vmatpush1.msra.mxu0 0.0
  %323 = vmatprep.subr.mxu0 0.0
  %324 = vmatpush1.msra.mxu0 0.0
  %325 = vmatprep.subr.mxu0 0.0
  %326 = vmatpush1.msra.mxu0 0.0
  %327 = vmatprep.mubr.f32.mxu0 0.0
  %328 = vmatmul.mubr.f32.gmra.mrb[0].mxu0 %v224
  %v329 = vpop.f32.mrb[0].mxu0
  %v330 = vadd.f32 0.0, %v329
  %v331 = vpop.f32.mrb[0].mxu0
  %332 = vmatprep.mubr.f32.mxu0 0.0
  %333 = vmatmul.mubr.f32.gmra.mrb[0].mxu0 %v227
  %v334 = vpop.f32.mrb[0].mxu0
  %v335 = vadd.f32 0.0, %v334
  %v336 = vpop.f32.mrb[0].mxu0
  %337 = vmatprep.mubr.f32.mxu0 0.0
  %338 = vmatmul.mubr.f32.gmra.mrb[0].mxu0 %v230
  %v339 = vpop.f32.mrb[0].mxu0
  %v340 = vadd.f32 0.0, %v339
  %v341 = vpop.f32.mrb[0].mxu0
  %342 = vmatprep.mubr.f32.mxu0 0.0
  %343 = vmatmul.mubr.f32.gmra.mrb[0].mxu0 %v233
  %v344 = vpop.f32.mrb[0].mxu0
  %v345 = vadd.f32 0.0, %v344
  %v346 = vpop.f32.mrb[0].mxu0
  %347 = vmatprep.mubr.f32.mxu0 0.0
  %348 = vmatmul.mubr.f32.gmra.mrb[0].mxu0 %v236
  %v349 = vpop.f32.mrb[0].mxu0
  %v350 = vadd.f32 0.0, %v349
  %v351 = vpop.f32.mrb[0].mxu0
  %352 = vmatprep.mubr.f32.mxu0 0.0
  %353 = vmatmul.mubr.f32.gmra.mrb[0].mxu0 %v239
  %v354 = vpop.f32.mrb[0].mxu0
  %v355 = vadd.f32 0.0, %v354
  %v356 = vpop.f32.mrb[0].mxu0
  %357 = vmatprep.mubr.f32.mxu0 0.0
  %358 = vmatmul.mubr.f32.gmra.mrb[0].mxu0 %v242
  %v359 = vpop.f32.mrb[0].mxu0
  %v360 = vadd.f32 0.0, %v359
  %v361 = vpop.f32.mrb[0].mxu0
  %362 = vmatprep.mubr.f32.mxu0 0.0
  %363 = vmatmul.mubr.f32.gmra.mrb[0].mxu0 %v245
  %v364 = vpop.f32.mrb[0].mxu0
  %v365 = vadd.f32 0.0, %v364
  %v366 = vpop.f32.mrb[0].mxu0
  %367 = vmatprep.mubr.f32.mxu0 0.0
  %368 = vmatmul.mubr.f32.gmra.mrb[0].mxu0 %v248
  %v369 = vpop.f32.mrb[0].mxu0
  %v370 = vadd.f32 0.0, %v369
  %v371 = vpop.f32.mrb[0].mxu0
  %372 = vmatprep.mubr.f32.mxu0 0.0
  %373 = vmatmul.mubr.f32.gmra.mrb[0].mxu0 %v251
  %v374 = vpop.f32.mrb[0].mxu0
  %v375 = vadd.f32 0.0, %v374
  %v376 = vpop.f32.mrb[0].mxu0
  %377 = vmatprep.mubr.f32.mxu0 0.0
  %378 = vmatmul.mubr.f32.gmra.mrb[0].mxu0 %v254
  %v379 = vpop.f32.mrb[0].mxu0
  %v380 = vadd.f32 0.0, %v379
  %v381 = vpop.f32.mrb[0].mxu0
  %382 = vmatprep.mubr.f32.mxu0 0.0
  %383 = vmatmul.mubr.f32.gmra.mrb[0].mxu0 %v257
  %v384 = vpop.f32.mrb[0].mxu0
  %v385 = vadd.f32 0.0, %v384
  %v386 = vpop.f32.mrb[0].mxu0
  %387 = vdwg.mxu0
  %392 = vrot.lane.b32.xlu0 %v350, 32
  %v393 = vpop.permute.xlu0 %392
  %394 = vrot.lane.b32.xlu0 %v355, 32
  %v395 = vpop.permute.xlu0 %394
  %396 = vrot.lane.b32.xlu0 %v360, 32
  %v397 = vpop.permute.xlu0 %396
  %398 = vrot.lane.b32.xlu0 %v365, 32
  %v399 = vpop.permute.xlu0 %398
  %408 = vrot.lane.b32.xlu0 %v370, 64
  %v409 = vpop.permute.xlu0 %408
  %410 = vrot.lane.b32.xlu0 %v375, 64
  %v411 = vpop.permute.xlu0 %410
  %412 = vrot.lane.b32.xlu0 %v380, 64
  %v413 = vpop.permute.xlu0 %412
  %414 = vrot.lane.b32.xlu0 %v385, 64
  %v415 = vpop.permute.xlu0 %414
  %v420 = vsel %vm70, %v330, %v393
  %v421 = vsel %vm70, %v335, %v395
  %v422 = vsel %vm70, %v340, %v397
  %v423 = vsel %vm70, %v345, %v399
  %vm424 = vcmask 523264
  %v425 = vsel %vm424, %v420, %v409
  %v426 = vsel %vm424, %v421, %v411
  %v427 = vsel %vm424, %v422, %v413
  %v428 = vsel %vm424, %v423, %v415
  %v429 = vld [vmem:[%s4] sm:$0xff]
  %v430 = vld [vmem:[%s4 + $0x8] sm:$0xff]
  %v431 = vld [vmem:[%s4 + $0x10] sm:$0xff]
  %v432 = vld [vmem:[%s4 + $0x18] sm:$0xff]
  %434 = vset.pattern.permute.xlu0 0
  %435 = vperm.xlu0 %434, %v429
  %v436 = vpop.permute.xlu0 %435
  %439 = vset.pattern.permute.xlu0 0
  %440 = vperm.xlu0 %439, %v430
  %v441 = vpop.permute.xlu0 %440
  %444 = vset.pattern.permute.xlu0 0
  %445 = vperm.xlu0 %444, %v431
  %v446 = vpop.permute.xlu0 %445
  %449 = vset.pattern.permute.xlu0 0
  %450 = vperm.xlu0 %449, %v432
  %v451 = vpop.permute.xlu0 %450
  %v453 = vadd.f32 %v425, %v436
  %v454 = vadd.f32 %v426, %v441
  %v455 = vadd.f32 %v427, %v446
  %v456 = vadd.f32 %v428, %v451
  %v457 = vld [vmem:[%s5] sm:$0xff]
  %v458 = vld [vmem:[%s5 + $0x8] sm:$0xff]
  %v459 = vld [vmem:[%s5 + $0x10] sm:$0xff]
  %v460 = vld [vmem:[%s5 + $0x18] sm:$0xff]
  %v461 = vld [vmem:[%s6] sm:$0xff]
  %v462 = vld [vmem:[%s6 + $0x8] sm:$0xff]
  %v463 = vld [vmem:[%s6 + $0x10] sm:$0xff]
  %v464 = vld [vmem:[%s6 + $0x18] sm:$0xff]
  %vm465 = vcmask 785408
  %v466 = vsel %vm465, %v453, 0.0
  %467 = vadd.xlane.f32.xlu0 %v466
  %v468 = vpop.xlane.xlu0 %467
  %v469 = vsel %vm465, %v454, 0.0
  %470 = vadd.xlane.f32.xlu0 %v469
  %v471 = vpop.xlane.xlu0 %470
  %v472 = vsel %vm465, %v455, 0.0
  %473 = vadd.xlane.f32.xlu0 %v472
  %v474 = vpop.xlane.xlu0 %473
  %v475 = vsel %vm465, %v456, 0.0
  %476 = vadd.xlane.f32.xlu0 %v475
  %v477 = vpop.xlane.xlu0 %476
  %v478 = vmul.f32 %v468, 0.010416667
  %v479 = vmul.f32 %v471, 0.010416667
  %v480 = vmul.f32 %v474, 0.010416667
  %v481 = vmul.f32 %v477, 0.010416667
  %v482 = vmul.f32 %v453, %v453
  %v483 = vmul.f32 %v454, %v454
  %v484 = vmul.f32 %v455, %v455
  %v485 = vmul.f32 %v456, %v456
  %v486 = vsel %vm465, %v482, 0.0
  %487 = vadd.xlane.f32.xlu0 %v486
  %v488 = vpop.xlane.xlu0 %487
  %v489 = vsel %vm465, %v483, 0.0
  %490 = vadd.xlane.f32.xlu0 %v489
  %v491 = vpop.xlane.xlu0 %490
  %v492 = vsel %vm465, %v484, 0.0
  %493 = vadd.xlane.f32.xlu0 %v492
  %v494 = vpop.xlane.xlu0 %493
  %v495 = vsel %vm465, %v485, 0.0
  %496 = vadd.xlane.f32.xlu0 %v495
  %v497 = vpop.xlane.xlu0 %496
  %v498 = vmul.f32 %v488, 0.010416667
  %v499 = vmul.f32 %v491, 0.010416667
  %v500 = vmul.f32 %v494, 0.010416667
  %v501 = vmul.f32 %v497, 0.010416667
  %v502 = vmul.f32 %v478, %v478
  %v503 = vmul.f32 %v479, %v479
  %v504 = vmul.f32 %v480, %v480
  %v505 = vmul.f32 %v481, %v481
  %v506 = vsub.f32 %v498, %v502
  %v507 = vsub.f32 %v499, %v503
  %v508 = vsub.f32 %v500, %v504
  %v509 = vsub.f32 %v501, %v505
  %v510 = vmax.f32 %v506, 0.0
  %v511 = vmax.f32 %v507, 0.0
  %v512 = vmax.f32 %v508, 0.0
  %v513 = vmax.f32 %v509, 0.0
  %v514 = vadd.f32 %v510, 0.8
  %v515 = vadd.f32 %v511, 0.8
  %v516 = vadd.f32 %v512, 0.8
  %v517 = vadd.f32 %v513, 0.8
  %v518 = vrsqrt.pop %v514
  %v519 = vrsqrt.pop %v515
  %v520 = vrsqrt.pop %v516
  %v521 = vrsqrt.pop %v517
  %v522 = vmul.f32 %v518, %v457
  %v523 = vmul.f32 %v519, %v458
  %v524 = vmul.f32 %v520, %v459
  %v525 = vmul.f32 %v521, %v460
  %v526 = vmul.f32 %v478, %v522
  %v527 = vmul.f32 %v479, %v523
  %v528 = vmul.f32 %v480, %v524
  %v529 = vmul.f32 %v481, %v525
  %v530 = vsub.f32 %v461, %v526
  %v531 = vsub.f32 %v462, %v527
  %v532 = vsub.f32 %v463, %v528
  %v533 = vsub.f32 %v464, %v529
  %535 = vset.pattern.permute.xlu0 0
  %536 = vperm.xlu0 %535, %v522
  %v537 = vpop.permute.xlu0 %536
  %540 = vset.pattern.permute.xlu0 0
  %541 = vperm.xlu0 %540, %v523
  %v542 = vpop.permute.xlu0 %541
  %545 = vset.pattern.permute.xlu0 0
  %546 = vperm.xlu0 %545, %v524
  %v547 = vpop.permute.xlu0 %546
  %550 = vset.pattern.permute.xlu0 0
  %551 = vperm.xlu0 %550, %v525
  %v552 = vpop.permute.xlu0 %551
  %v554 = vmul.f32 %v453, %v537
  %v555 = vmul.f32 %v454, %v542
  %v556 = vmul.f32 %v455, %v547
  %v557 = vmul.f32 %v456, %v552
  %559 = vset.pattern.permute.xlu0 0
  %560 = vperm.xlu0 %559, %v530
  %v561 = vpop.permute.xlu0 %560
  %564 = vset.pattern.permute.xlu0 0
  %565 = vperm.xlu0 %564, %v531
  %v566 = vpop.permute.xlu0 %565
  %569 = vset.pattern.permute.xlu0 0
  %570 = vperm.xlu0 %569, %v532
  %v571 = vpop.permute.xlu0 %570
  %574 = vset.pattern.permute.xlu0 0
  %575 = vperm.xlu0 %574, %v533
  %v576 = vpop.permute.xlu0 %575
  %v578 = vadd.f32 %v554, %v561
  %v579 = vadd.f32 %v555, %v566
  %v580 = vadd.f32 %v556, %v571
  %v581 = vadd.f32 %v557, %v576
  %v582 = vmax.f32 %v578, 0.0
  %v583 = vmax.f32 %v579, 0.0
  %v584 = vmax.f32 %v580, 0.0
  %v585 = vmax.f32 %v581, 0.0
  %v586 = vld [vmem:[%s7] sm:$0xff]
  %v587 = vld [vmem:[%s7 + $0x8] sm:$0xff]
  %v588 = vld [vmem:[%s7 + $0x10] sm:$0xff]
  %v589 = vld [vmem:[%s7 + $0x18] sm:$0xff]
  %v590 = vld [vmem:[%s7 + $0x20] sm:$0xff]
  %v591 = vld [vmem:[%s7 + $0x28] sm:$0xff]
  %v592 = vld [vmem:[%s7 + $0x30] sm:$0xff]
  %v593 = vld [vmem:[%s7 + $0x38] sm:$0xff]
  %v594 = vld [vmem:[%s8] sm:$0xff]
  %v595 = vld [vmem:[%s8 + $0x8] sm:$0xff]
  %v596 = vld [vmem:[%s8 + $0x10] sm:$0xff]
  %v597 = vld [vmem:[%s8 + $0x18] sm:$0xff]
  %v598 = vld [vmem:[%s8 + $0x20] sm:$0xff]
  %v599 = vld [vmem:[%s8 + $0x28] sm:$0xff]
  %v600 = vld [vmem:[%s8 + $0x30] sm:$0xff]
  %v601 = vld [vmem:[%s8 + $0x38] sm:$0xff]
  %603 = vset.pattern.permute.xlu0 0
  %604 = vperm.xlu0 %603, %v594
  %v605 = vpop.permute.xlu0 %604
  %608 = vset.pattern.permute.xlu0 0
  %609 = vperm.xlu0 %608, %v595
  %v610 = vpop.permute.xlu0 %609
  %613 = vset.pattern.permute.xlu0 0
  %614 = vperm.xlu0 %613, %v596
  %v615 = vpop.permute.xlu0 %614
  %618 = vset.pattern.permute.xlu0 0
  %619 = vperm.xlu0 %618, %v597
  %v620 = vpop.permute.xlu0 %619
  %623 = vset.pattern.permute.xlu0 0
  %624 = vperm.xlu0 %623, %v598
  %v625 = vpop.permute.xlu0 %624
  %628 = vset.pattern.permute.xlu0 0
  %629 = vperm.xlu0 %628, %v599
  %v630 = vpop.permute.xlu0 %629
  %633 = vset.pattern.permute.xlu0 0
  %634 = vperm.xlu0 %633, %v600
  %v635 = vpop.permute.xlu0 %634
  %638 = vset.pattern.permute.xlu0 0
  %639 = vperm.xlu0 %638, %v601
  %v640 = vpop.permute.xlu0 %639
  %v643 = vsel %vm70, %v586, 0
  %v646 = vsel %vm70, %v587, 0
  %v649 = vsel %vm70, %v588, 0
  %v652 = vsel %vm70, %v589, 0
  %v655 = vsel %vm70, %v590, 0
  %v658 = vsel %vm70, %v591, 0
  %v661 = vsel %vm70, %v592, 0
  %v664 = vsel %vm70, %v593, 0
  %666 = vmatprep.subr.mxu0 0.0
  %667 = vmatpush1.msra.mxu0 %v582
  %668 = vmatprep.subr.mxu0 0.0
  %669 = vmatpush1.msra.mxu0 %v583
  %670 = vmatprep.subr.mxu0 0.0
  %671 = vmatpush1.msra.mxu0 %v584
  %672 = vmatprep.subr.mxu0 0.0
  %673 = vmatpush1.msra.mxu0 %v585
  %674 = vmatprep.subr.mxu0 0.0
  %675 = vmatpush1.msra.mxu0 0.0
  %676 = vmatprep.subr.mxu0 0.0
  %677 = vmatpush1.msra.mxu0 0.0
  %678 = vmatprep.subr.mxu0 0.0
  %679 = vmatpush1.msra.mxu0 0.0
  %680 = vmatprep.subr.mxu0 0.0
  %681 = vmatpush1.msra.mxu0 0.0
  %682 = vmatprep.subr.mxu0 0.0
  %683 = vmatpush1.msra.mxu0 0.0
  %684 = vmatprep.subr.mxu0 0.0
  %685 = vmatpush1.msra.mxu0 0.0
  %686 = vmatprep.subr.mxu0 0.0
  %687 = vmatpush1.msra.mxu0 0.0
  %688 = vmatprep.subr.mxu0 0.0
  %689 = vmatpush1.msra.mxu0 0.0
  %690 = vmatprep.subr.mxu0 0.0
  %691 = vmatpush1.msra.mxu0 0.0
  %692 = vmatprep.subr.mxu0 0.0
  %693 = vmatpush1.msra.mxu0 0.0
  %694 = vmatprep.subr.mxu0 0.0
  %695 = vmatpush1.msra.mxu0 0.0
  %696 = vmatprep.subr.mxu0 0.0
  %697 = vmatpush1.msra.mxu0 0.0
  %698 = vmatprep.subr.mxu0 0.0
  %699 = vmatpush1.msra.mxu0 0.0
  %700 = vmatprep.subr.mxu0 0.0
  %701 = vmatpush1.msra.mxu0 0.0
  %702 = vmatprep.subr.mxu0 0.0
  %703 = vmatpush1.msra.mxu0 0.0
  %704 = vmatprep.subr.mxu0 0.0
  %705 = vmatpush1.msra.mxu0 0.0
  %706 = vmatprep.subr.mxu0 0.0
  %707 = vmatpush1.msra.mxu0 0.0
  %708 = vmatprep.subr.mxu0 0.0
  %709 = vmatpush1.msra.mxu0 0.0
  %710 = vmatprep.subr.mxu0 0.0
  %711 = vmatpush1.msra.mxu0 0.0
  %712 = vmatprep.subr.mxu0 0.0
  %713 = vmatpush1.msra.mxu0 0.0
  %714 = vmatprep.subr.mxu0 0.0
  %715 = vmatpush1.msra.mxu0 0.0
  %716 = vmatprep.subr.mxu0 0.0
  %717 = vmatpush1.msra.mxu0 0.0
  %718 = vmatprep.subr.mxu0 0.0
  %719 = vmatpush1.msra.mxu0 0.0
  %720 = vmatprep.subr.mxu0 0.0
  %721 = vmatpush1.msra.mxu0 0.0
  %722 = vmatprep.subr.mxu0 0.0
  %723 = vmatpush1.msra.mxu0 0.0
  %724 = vmatprep.subr.mxu0 0.0
  %725 = vmatpush1.msra.mxu0 0.0
  %726 = vmatprep.subr.mxu0 0.0
  %727 = vmatpush1.msra.mxu0 0.0
  %728 = vmatprep.subr.mxu0 0.0
  %729 = vmatpush1.msra.mxu0 0.0
  %730 = vmatprep.mubr.f32.mxu0 0.0
  %731 = vmatmul.mubr.f32.gmra.mrb[0].mxu0 %v643
  %v732 = vpop.f32.mrb[0].mxu0
  %v733 = vadd.f32 %v605, %v732
  %v734 = vpop.f32.mrb[0].mxu0
  %735 = vmatprep.mubr.f32.mxu0 0.0
  %736 = vmatmul.mubr.f32.gmra.mrb[0].mxu0 %v646
  %v737 = vpop.f32.mrb[0].mxu0
  %v738 = vadd.f32 %v610, %v737
  %v739 = vpop.f32.mrb[0].mxu0
  %740 = vmatprep.mubr.f32.mxu0 0.0
  %741 = vmatmul.mubr.f32.gmra.mrb[0].mxu0 %v649
  %v742 = vpop.f32.mrb[0].mxu0
  %v743 = vadd.f32 %v615, %v742
  %v744 = vpop.f32.mrb[0].mxu0
  %745 = vmatprep.mubr.f32.mxu0 0.0
  %746 = vmatmul.mubr.f32.gmra.mrb[0].mxu0 %v652
  %v747 = vpop.f32.mrb[0].mxu0
  %v748 = vadd.f32 %v620, %v747
  %v749 = vpop.f32.mrb[0].mxu0
  %750 = vmatprep.mubr.f32.mxu0 0.0
  %751 = vmatmul.mubr.f32.gmra.mrb[0].mxu0 %v655
  %v752 = vpop.f32.mrb[0].mxu0
  %v753 = vadd.f32 %v625, %v752
  %v754 = vpop.f32.mrb[0].mxu0
  %755 = vmatprep.mubr.f32.mxu0 0.0
  %756 = vmatmul.mubr.f32.gmra.mrb[0].mxu0 %v658
  %v757 = vpop.f32.mrb[0].mxu0
  %v758 = vadd.f32 %v630, %v757
  %v759 = vpop.f32.mrb[0].mxu0
  %760 = vmatprep.mubr.f32.mxu0 0.0
  %761 = vmatmul.mubr.f32.gmra.mrb[0].mxu0 %v661
  %v762 = vpop.f32.mrb[0].mxu0
  %v763 = vadd.f32 %v635, %v762
  %v764 = vpop.f32.mrb[0].mxu0
  %765 = vmatprep.mubr.f32.mxu0 0.0
  %766 = vmatmul.mubr.f32.gmra.mrb[0].mxu0 %v664
  %v767 = vpop.f32.mrb[0].mxu0
  %v768 = vadd.f32 %v640, %v767
  %v769 = vpop.f32.mrb[0].mxu0
  %770 = vdwg.mxu0
  %v771 = vld [vmem:[%s9] sm:$0xff]
  %v772 = vld [vmem:[%s9 + $0x8] sm:$0xff]
  %v773 = vld [vmem:[%s9 + $0x10] sm:$0xff]
  %v774 = vld [vmem:[%s9 + $0x18] sm:$0xff]
  %v775 = vld [vmem:[%s9 + $0x20] sm:$0xff]
  %v776 = vld [vmem:[%s9 + $0x28] sm:$0xff]
  %v777 = vld [vmem:[%s9 + $0x30] sm:$0xff]
  %v778 = vld [vmem:[%s9 + $0x38] sm:$0xff]
  %v779 = vld [vmem:[%s10] sm:$0xff]
  %v780 = vld [vmem:[%s10 + $0x8] sm:$0xff]
  %v781 = vld [vmem:[%s10 + $0x10] sm:$0xff]
  %v782 = vld [vmem:[%s10 + $0x18] sm:$0xff]
  %v783 = vld [vmem:[%s10 + $0x20] sm:$0xff]
  %v784 = vld [vmem:[%s10 + $0x28] sm:$0xff]
  %v785 = vld [vmem:[%s10 + $0x30] sm:$0xff]
  %v786 = vld [vmem:[%s10 + $0x38] sm:$0xff]
  %v787 = vsel %vm465, %v733, 0.0
  %788 = vadd.xlane.f32.xlu0 %v787
  %v789 = vpop.xlane.xlu0 %788
  %v790 = vsel %vm465, %v738, 0.0
  %791 = vadd.xlane.f32.xlu0 %v790
  %v792 = vpop.xlane.xlu0 %791
  %v793 = vsel %vm465, %v743, 0.0
  %794 = vadd.xlane.f32.xlu0 %v793
  %v795 = vpop.xlane.xlu0 %794
  %v796 = vsel %vm465, %v748, 0.0
  %797 = vadd.xlane.f32.xlu0 %v796
  %v798 = vpop.xlane.xlu0 %797
  %v799 = vsel %vm465, %v753, 0.0
  %800 = vadd.xlane.f32.xlu0 %v799
  %v801 = vpop.xlane.xlu0 %800
  %v802 = vsel %vm465, %v758, 0.0
  %803 = vadd.xlane.f32.xlu0 %v802
  %v804 = vpop.xlane.xlu0 %803
  %v805 = vsel %vm465, %v763, 0.0
  %806 = vadd.xlane.f32.xlu0 %v805
  %v807 = vpop.xlane.xlu0 %806
  %v808 = vsel %vm465, %v768, 0.0
  %809 = vadd.xlane.f32.xlu0 %v808
  %v810 = vpop.xlane.xlu0 %809
  %v811 = vmul.f32 %v789, 0.010416667
  %v812 = vmul.f32 %v792, 0.010416667
  %v813 = vmul.f32 %v795, 0.010416667
  %v814 = vmul.f32 %v798, 0.010416667
  %v815 = vmul.f32 %v801, 0.010416667
  %v816 = vmul.f32 %v804, 0.010416667
  %v817 = vmul.f32 %v807, 0.010416667
  %v818 = vmul.f32 %v810, 0.010416667
  %v819 = vmul.f32 %v733, %v733
  %v820 = vmul.f32 %v738, %v738
  %v821 = vmul.f32 %v743, %v743
  %v822 = vmul.f32 %v748, %v748
  %v823 = vmul.f32 %v753, %v753
  %v824 = vmul.f32 %v758, %v758
  %v825 = vmul.f32 %v763, %v763
  %v826 = vmul.f32 %v768, %v768
  %v827 = vsel %vm465, %v819, 0.0
  %828 = vadd.xlane.f32.xlu0 %v827
  %v829 = vpop.xlane.xlu0 %828
  %v830 = vsel %vm465, %v820, 0.0
  %831 = vadd.xlane.f32.xlu0 %v830
  %v832 = vpop.xlane.xlu0 %831
  %v833 = vsel %vm465, %v821, 0.0
  %834 = vadd.xlane.f32.xlu0 %v833
  %v835 = vpop.xlane.xlu0 %834
  %v836 = vsel %vm465, %v822, 0.0
  %837 = vadd.xlane.f32.xlu0 %v836
  %v838 = vpop.xlane.xlu0 %837
  %v839 = vsel %vm465, %v823, 0.0
  %840 = vadd.xlane.f32.xlu0 %v839
  %v841 = vpop.xlane.xlu0 %840
  %v842 = vsel %vm465, %v824, 0.0
  %843 = vadd.xlane.f32.xlu0 %v842
  %v844 = vpop.xlane.xlu0 %843
  %v845 = vsel %vm465, %v825, 0.0
  %846 = vadd.xlane.f32.xlu0 %v845
  %v847 = vpop.xlane.xlu0 %846
  %v848 = vsel %vm465, %v826, 0.0
  %849 = vadd.xlane.f32.xlu0 %v848
  %v850 = vpop.xlane.xlu0 %849
  %v851 = vmul.f32 %v829, 0.010416667
  %v852 = vmul.f32 %v832, 0.010416667
  %v853 = vmul.f32 %v835, 0.010416667
  %v854 = vmul.f32 %v838, 0.010416667
  %v855 = vmul.f32 %v841, 0.010416667
  %v856 = vmul.f32 %v844, 0.010416667
  %v857 = vmul.f32 %v847, 0.010416667
  %v858 = vmul.f32 %v850, 0.010416667
  %v859 = vmul.f32 %v811, %v811
  %v860 = vmul.f32 %v812, %v812
  %v861 = vmul.f32 %v813, %v813
  %v862 = vmul.f32 %v814, %v814
  %v863 = vmul.f32 %v815, %v815
  %v864 = vmul.f32 %v816, %v816
  %v865 = vmul.f32 %v817, %v817
  %v866 = vmul.f32 %v818, %v818
  %v867 = vsub.f32 %v851, %v859
  %v868 = vsub.f32 %v852, %v860
  %v869 = vsub.f32 %v853, %v861
  %v870 = vsub.f32 %v854, %v862
  %v871 = vsub.f32 %v855, %v863
  %v872 = vsub.f32 %v856, %v864
  %v873 = vsub.f32 %v857, %v865
  %v874 = vsub.f32 %v858, %v866
  %v875 = vmax.f32 %v867, 0.0
  %v876 = vmax.f32 %v868, 0.0
  %v877 = vmax.f32 %v869, 0.0
  %v878 = vmax.f32 %v870, 0.0
  %v879 = vmax.f32 %v871, 0.0
  %v880 = vmax.f32 %v872, 0.0
  %v881 = vmax.f32 %v873, 0.0
  %v882 = vmax.f32 %v874, 0.0
  %v883 = vadd.f32 %v875, 1e-05
  %v884 = vadd.f32 %v876, 1e-05
  %v885 = vadd.f32 %v877, 1e-05
  %v886 = vadd.f32 %v878, 1e-05
  %v887 = vadd.f32 %v879, 1e-05
  %v888 = vadd.f32 %v880, 1e-05
  %v889 = vadd.f32 %v881, 1e-05
  %v890 = vadd.f32 %v882, 1e-05
  %v891 = vrsqrt.pop %v883
  %v892 = vrsqrt.pop %v884
  %v893 = vrsqrt.pop %v885
  %v894 = vrsqrt.pop %v886
  %v895 = vrsqrt.pop %v887
  %v896 = vrsqrt.pop %v888
  %v897 = vrsqrt.pop %v889
  %v898 = vrsqrt.pop %v890
  %v899 = vmul.f32 %v891, %v771
  %v900 = vmul.f32 %v892, %v772
  %v901 = vmul.f32 %v893, %v773
  %v902 = vmul.f32 %v894, %v774
  %v903 = vmul.f32 %v895, %v775
  %v904 = vmul.f32 %v896, %v776
  %v905 = vmul.f32 %v897, %v777
  %v906 = vmul.f32 %v898, %v778
  %v907 = vmul.f32 %v811, %v899
  %v908 = vmul.f32 %v812, %v900
  %v909 = vmul.f32 %v813, %v901
  %v910 = vmul.f32 %v814, %v902
  %v911 = vmul.f32 %v815, %v903
  %v912 = vmul.f32 %v816, %v904
  %v913 = vmul.f32 %v817, %v905
  %v914 = vmul.f32 %v818, %v906
  %v915 = vsub.f32 %v779, %v907
  %v916 = vsub.f32 %v780, %v908
  %v917 = vsub.f32 %v781, %v909
  %v918 = vsub.f32 %v782, %v910
  %v919 = vsub.f32 %v783, %v911
  %v920 = vsub.f32 %v784, %v912
  %v921 = vsub.f32 %v785, %v913
  %v922 = vsub.f32 %v786, %v914
  %924 = vset.pattern.permute.xlu0 0
  %925 = vperm.xlu0 %924, %v899
  %v926 = vpop.permute.xlu0 %925
  %929 = vset.pattern.permute.xlu0 0
  %930 = vperm.xlu0 %929, %v900
  %v931 = vpop.permute.xlu0 %930
  %934 = vset.pattern.permute.xlu0 0
  %935 = vperm.xlu0 %934, %v901
  %v936 = vpop.permute.xlu0 %935
  %939 = vset.pattern.permute.xlu0 0
  %940 = vperm.xlu0 %939, %v902
  %v941 = vpop.permute.xlu0 %940
  %944 = vset.pattern.permute.xlu0 0
  %945 = vperm.xlu0 %944, %v903
  %v946 = vpop.permute.xlu0 %945
  %949 = vset.pattern.permute.xlu0 0
  %950 = vperm.xlu0 %949, %v904
  %v951 = vpop.permute.xlu0 %950
  %954 = vset.pattern.permute.xlu0 0
  %955 = vperm.xlu0 %954, %v905
  %v956 = vpop.permute.xlu0 %955
  %959 = vset.pattern.permute.xlu0 0
  %960 = vperm.xlu0 %959, %v906
  %v961 = vpop.permute.xlu0 %960
  %v963 = vmul.f32 %v733, %v926
  %v964 = vmul.f32 %v738, %v931
  %v965 = vmul.f32 %v743, %v936
  %v966 = vmul.f32 %v748, %v941
  %v967 = vmul.f32 %v753, %v946
  %v968 = vmul.f32 %v758, %v951
  %v969 = vmul.f32 %v763, %v956
  %v970 = vmul.f32 %v768, %v961
  %972 = vset.pattern.permute.xlu0 0
  %973 = vperm.xlu0 %972, %v915
  %v974 = vpop.permute.xlu0 %973
  %977 = vset.pattern.permute.xlu0 0
  %978 = vperm.xlu0 %977, %v916
  %v979 = vpop.permute.xlu0 %978
  %982 = vset.pattern.permute.xlu0 0
  %983 = vperm.xlu0 %982, %v917
  %v984 = vpop.permute.xlu0 %983
  %987 = vset.pattern.permute.xlu0 0
  %988 = vperm.xlu0 %987, %v918
  %v989 = vpop.permute.xlu0 %988
  %992 = vset.pattern.permute.xlu0 0
  %993 = vperm.xlu0 %992, %v919
  %v994 = vpop.permute.xlu0 %993
  %997 = vset.pattern.permute.xlu0 0
  %998 = vperm.xlu0 %997, %v920
  %v999 = vpop.permute.xlu0 %998
  %1002 = vset.pattern.permute.xlu0 0
  %1003 = vperm.xlu0 %1002, %v921
  %v1004 = vpop.permute.xlu0 %1003
  %1007 = vset.pattern.permute.xlu0 0
  %1008 = vperm.xlu0 %1007, %v922
  %v1009 = vpop.permute.xlu0 %1008
  %v1011 = vadd.f32 %v963, %v974
  %v1012 = vadd.f32 %v964, %v979
  %v1013 = vadd.f32 %v965, %v984
  %v1014 = vadd.f32 %v966, %v989
  %v1015 = vadd.f32 %v967, %v994
  %v1016 = vadd.f32 %v968, %v999
  %v1017 = vadd.f32 %v969, %v1004
  %v1018 = vadd.f32 %v970, %v1009
  %v1019 = vmax.f32 %v1011, 0.0
  %v1020 = vmax.f32 %v1012, 0.0
  %v1021 = vmax.f32 %v1013, 0.0
  %v1022 = vmax.f32 %v1014, 0.0
  %v1023 = vmax.f32 %v1015, 0.0
  %v1024 = vmax.f32 %v1016, 0.0
  %v1025 = vmax.f32 %v1017, 0.0
  %v1026 = vmax.f32 %v1018, 0.0
  %v1027 = vld [vmem:[%s11] sm:$0xff]
  %v1028 = vld [vmem:[%s11 + $0x8] sm:$0xff]
  %v1029 = vld [vmem:[%s11 + $0x10] sm:$0xff]
  %v1030 = vld [vmem:[%s11 + $0x18] sm:$0xff]
  %v1031 = vld [vmem:[%s12] sm:$0xff]
  %v1032 = vld [vmem:[%s12 + $0x8] sm:$0xff]
  %v1033 = vld [vmem:[%s12 + $0x10] sm:$0xff]
  %v1034 = vld [vmem:[%s12 + $0x18] sm:$0xff]
  %1036 = vset.pattern.permute.xlu0 0
  %1037 = vperm.xlu0 %1036, %v1031
  %v1038 = vpop.permute.xlu0 %1037
  %1041 = vset.pattern.permute.xlu0 0
  %1042 = vperm.xlu0 %1041, %v1032
  %v1043 = vpop.permute.xlu0 %1042
  %1046 = vset.pattern.permute.xlu0 0
  %1047 = vperm.xlu0 %1046, %v1033
  %v1048 = vpop.permute.xlu0 %1047
  %1051 = vset.pattern.permute.xlu0 0
  %1052 = vperm.xlu0 %1051, %v1034
  %v1053 = vpop.permute.xlu0 %1052
  %v1056 = vsel %vm424, %v1027, 0
  %v1059 = vsel %vm424, %v1028, 0
  %v1062 = vsel %vm424, %v1029, 0
  %v1065 = vsel %vm424, %v1030, 0
  %1067 = vmatprep.subr.mxu0 0.0
  %1068 = vmatpush1.msra.mxu0 %v1019
  %1069 = vmatprep.subr.mxu0 0.0
  %1070 = vmatpush1.msra.mxu0 %v1020
  %1071 = vmatprep.subr.mxu0 0.0
  %1072 = vmatpush1.msra.mxu0 %v1021
  %1073 = vmatprep.subr.mxu0 0.0
  %1074 = vmatpush1.msra.mxu0 %v1022
  %1075 = vmatprep.subr.mxu0 0.0
  %1076 = vmatpush1.msra.mxu0 %v1023
  %1077 = vmatprep.subr.mxu0 0.0
  %1078 = vmatpush1.msra.mxu0 %v1024
  %1079 = vmatprep.subr.mxu0 0.0
  %1080 = vmatpush1.msra.mxu0 %v1025
  %1081 = vmatprep.subr.mxu0 0.0
  %1082 = vmatpush1.msra.mxu0 %v1026
  %1083 = vmatprep.subr.mxu0 0.0
  %1084 = vmatpush1.msra.mxu0 0.0
  %1085 = vmatprep.subr.mxu0 0.0
  %1086 = vmatpush1.msra.mxu0 0.0
  %1087 = vmatprep.subr.mxu0 0.0
  %1088 = vmatpush1.msra.mxu0 0.0
  %1089 = vmatprep.subr.mxu0 0.0
  %1090 = vmatpush1.msra.mxu0 0.0
  %1091 = vmatprep.subr.mxu0 0.0
  %1092 = vmatpush1.msra.mxu0 0.0
  %1093 = vmatprep.subr.mxu0 0.0
  %1094 = vmatpush1.msra.mxu0 0.0
  %1095 = vmatprep.subr.mxu0 0.0
  %1096 = vmatpush1.msra.mxu0 0.0
  %1097 = vmatprep.subr.mxu0 0.0
  %1098 = vmatpush1.msra.mxu0 0.0
  %1099 = vmatprep.subr.mxu0 0.0
  %1100 = vmatpush1.msra.mxu0 0.0
  %1101 = vmatprep.subr.mxu0 0.0
  %1102 = vmatpush1.msra.mxu0 0.0
  %1103 = vmatprep.subr.mxu0 0.0
  %1104 = vmatpush1.msra.mxu0 0.0
  %1105 = vmatprep.subr.mxu0 0.0
  %1106 = vmatpush1.msra.mxu0 0.0
  %1107 = vmatprep.subr.mxu0 0.0
  %1108 = vmatpush1.msra.mxu0 0.0
  %1109 = vmatprep.subr.mxu0 0.0
  %1110 = vmatpush1.msra.mxu0 0.0
  %1111 = vmatprep.subr.mxu0 0.0
  %1112 = vmatpush1.msra.mxu0 0.0
  %1113 = vmatprep.subr.mxu0 0.0
  %1114 = vmatpush1.msra.mxu0 0.0
  %1115 = vmatprep.subr.mxu0 0.0
  %1116 = vmatpush1.msra.mxu0 0.0
  %1117 = vmatprep.subr.mxu0 0.0
  %1118 = vmatpush1.msra.mxu0 0.0
  %1119 = vmatprep.subr.mxu0 0.0
  %1120 = vmatpush1.msra.mxu0 0.0
  %1121 = vmatprep.subr.mxu0 0.0
  %1122 = vmatpush1.msra.mxu0 0.0
  %1123 = vmatprep.subr.mxu0 0.0
  %1124 = vmatpush1.msra.mxu0 0.0
  %1125 = vmatprep.subr.mxu0 0.0
  %1126 = vmatpush1.msra.mxu0 0.0
  %1127 = vmatprep.subr.mxu0 0.0
  %1128 = vmatpush1.msra.mxu0 0.0
  %1129 = vmatprep.subr.mxu0 0.0
  %1130 = vmatpush1.msra.mxu0 0.0
  %1131 = vmatprep.mubr.f32.mxu0 0.0
  %1132 = vmatmul.mubr.f32.gmra.mrb[0].mxu0 %v1056
  %v1133 = vpop.f32.mrb[0].mxu0
  %v1134 = vadd.f32 %v1038, %v1133
  %v1135 = vpop.f32.mrb[0].mxu0
  %1136 = vmatprep.mubr.f32.mxu0 0.0
  %1137 = vmatmul.mubr.f32.gmra.mrb[0].mxu0 %v1059
  %v1138 = vpop.f32.mrb[0].mxu0
  %v1139 = vadd.f32 %v1043, %v1138
  %v1140 = vpop.f32.mrb[0].mxu0
  %1141 = vmatprep.mubr.f32.mxu0 0.0
  %1142 = vmatmul.mubr.f32.gmra.mrb[0].mxu0 %v1062
  %v1143 = vpop.f32.mrb[0].mxu0
  %v1144 = vadd.f32 %v1048, %v1143
  %v1145 = vpop.f32.mrb[0].mxu0
  %1146 = vmatprep.mubr.f32.mxu0 0.0
  %1147 = vmatmul.mubr.f32.gmra.mrb[0].mxu0 %v1065
  %v1148 = vpop.f32.mrb[0].mxu0
  %v1149 = vadd.f32 %v1053, %v1148
  %v1150 = vpop.f32.mrb[0].mxu0
  %1151 = vdwg.mxu0
  %v1152 = vld [vmem:[%s13] sm:$0xff]
  %v1153 = vld [vmem:[%s13 + $0x8] sm:$0xff]
  %v1154 = vld [vmem:[%s13 + $0x10] sm:$0xff]
  %v1155 = vld [vmem:[%s13 + $0x18] sm:$0xff]
  %v1156 = vld [vmem:[%s14] sm:$0xff]
  %v1157 = vld [vmem:[%s14 + $0x8] sm:$0xff]
  %v1158 = vld [vmem:[%s14 + $0x10] sm:$0xff]
  %v1159 = vld [vmem:[%s14 + $0x18] sm:$0xff]
  %v1160 = vsel %vm465, %v1134, 0.0
  %1161 = vadd.xlane.f32.xlu0 %v1160
  %v1162 = vpop.xlane.xlu0 %1161
  %v1163 = vsel %vm465, %v1139, 0.0
  %1164 = vadd.xlane.f32.xlu0 %v1163
  %v1165 = vpop.xlane.xlu0 %1164
  %v1166 = vsel %vm465, %v1144, 0.0
  %1167 = vadd.xlane.f32.xlu0 %v1166
  %v1168 = vpop.xlane.xlu0 %1167
  %v1169 = vsel %vm465, %v1149, 0.0
  %1170 = vadd.xlane.f32.xlu0 %v1169
  %v1171 = vpop.xlane.xlu0 %1170
  %v1172 = vmul.f32 %v1162, 0.010416667
  %v1173 = vmul.f32 %v1165, 0.010416667
  %v1174 = vmul.f32 %v1168, 0.010416667
  %v1175 = vmul.f32 %v1171, 0.010416667
  %v1176 = vmul.f32 %v1134, %v1134
  %v1177 = vmul.f32 %v1139, %v1139
  %v1178 = vmul.f32 %v1144, %v1144
  %v1179 = vmul.f32 %v1149, %v1149
  %v1180 = vsel %vm465, %v1176, 0.0
  %1181 = vadd.xlane.f32.xlu0 %v1180
  %v1182 = vpop.xlane.xlu0 %1181
  %v1183 = vsel %vm465, %v1177, 0.0
  %1184 = vadd.xlane.f32.xlu0 %v1183
  %v1185 = vpop.xlane.xlu0 %1184
  %v1186 = vsel %vm465, %v1178, 0.0
  %1187 = vadd.xlane.f32.xlu0 %v1186
  %v1188 = vpop.xlane.xlu0 %1187
  %v1189 = vsel %vm465, %v1179, 0.0
  %1190 = vadd.xlane.f32.xlu0 %v1189
  %v1191 = vpop.xlane.xlu0 %1190
  %v1192 = vmul.f32 %v1182, 0.010416667
  %v1193 = vmul.f32 %v1185, 0.010416667
  %v1194 = vmul.f32 %v1188, 0.010416667
  %v1195 = vmul.f32 %v1191, 0.010416667
  %v1196 = vmul.f32 %v1172, %v1172
  %v1197 = vmul.f32 %v1173, %v1173
  %v1198 = vmul.f32 %v1174, %v1174
  %v1199 = vmul.f32 %v1175, %v1175
  %v1200 = vsub.f32 %v1192, %v1196
  %v1201 = vsub.f32 %v1193, %v1197
  %v1202 = vsub.f32 %v1194, %v1198
  %v1203 = vsub.f32 %v1195, %v1199
  %v1204 = vmax.f32 %v1200, 0.0
  %v1205 = vmax.f32 %v1201, 0.0
  %v1206 = vmax.f32 %v1202, 0.0
  %v1207 = vmax.f32 %v1203, 0.0
  %v1208 = vadd.f32 %v1204, 1e-05
  %v1209 = vadd.f32 %v1205, 1e-05
  %v1210 = vadd.f32 %v1206, 1e-05
  %v1211 = vadd.f32 %v1207, 1e-05
  %v1212 = vrsqrt.pop %v1208
  %v1213 = vrsqrt.pop %v1209
  %v1214 = vrsqrt.pop %v1210
  %v1215 = vrsqrt.pop %v1211
  %v1216 = vmul.f32 %v1212, %v1152
  %v1217 = vmul.f32 %v1213, %v1153
  %v1218 = vmul.f32 %v1214, %v1154
  %v1219 = vmul.f32 %v1215, %v1155
  %v1220 = vmul.f32 %v1172, %v1216
  %v1221 = vmul.f32 %v1173, %v1217
  %v1222 = vmul.f32 %v1174, %v1218
  %v1223 = vmul.f32 %v1175, %v1219
  %v1224 = vsub.f32 %v1156, %v1220
  %v1225 = vsub.f32 %v1157, %v1221
  %v1226 = vsub.f32 %v1158, %v1222
  %v1227 = vsub.f32 %v1159, %v1223
  %1229 = vset.pattern.permute.xlu0 0
  %1230 = vperm.xlu0 %1229, %v1216
  %v1231 = vpop.permute.xlu0 %1230
  %1234 = vset.pattern.permute.xlu0 0
  %1235 = vperm.xlu0 %1234, %v1217
  %v1236 = vpop.permute.xlu0 %1235
  %1239 = vset.pattern.permute.xlu0 0
  %1240 = vperm.xlu0 %1239, %v1218
  %v1241 = vpop.permute.xlu0 %1240
  %1244 = vset.pattern.permute.xlu0 0
  %1245 = vperm.xlu0 %1244, %v1219
  %v1246 = vpop.permute.xlu0 %1245
  %v1248 = vmul.f32 %v1134, %v1231
  %v1249 = vmul.f32 %v1139, %v1236
  %v1250 = vmul.f32 %v1144, %v1241
  %v1251 = vmul.f32 %v1149, %v1246
  %1253 = vset.pattern.permute.xlu0 0
  %1254 = vperm.xlu0 %1253, %v1224
  %v1255 = vpop.permute.xlu0 %1254
  %1258 = vset.pattern.permute.xlu0 0
  %1259 = vperm.xlu0 %1258, %v1225
  %v1260 = vpop.permute.xlu0 %1259
  %1263 = vset.pattern.permute.xlu0 0
  %1264 = vperm.xlu0 %1263, %v1226
  %v1265 = vpop.permute.xlu0 %1264
  %1268 = vset.pattern.permute.xlu0 0
  %1269 = vperm.xlu0 %1268, %v1227
  %v1270 = vpop.permute.xlu0 %1269
  %v1272 = vadd.f32 %v1248, %v1255
  %v1273 = vadd.f32 %v1249, %v1260
  %v1274 = vadd.f32 %v1250, %v1265
  %v1275 = vadd.f32 %v1251, %v1270
  %v1276 = vmax.f32 %v1272, 0.0
  %v1277 = vmax.f32 %v1273, 0.0
  %v1278 = vmax.f32 %v1274, 0.0
  %v1279 = vmax.f32 %v1275, 0.0
  %v1280 = vld [vmem:[%s15] sm:$0x1]
  %v1281 = vld [vmem:[#allocation2] sm:$0x1]
  %1283 = vset.pattern.permute.xlu0 0
  %1284 = vperm.xlu0 %1283, %v1281
  %v1285 = vpop.permute.xlu0 %1284
  %v1287 = vlaneseq
  %v1288 = vshrl.u32 %v1287, 7
  %v1289 = vsub.s32 0, %v1288
  %v1290 = vrot.slane %v1285, %v1289
  %v1292 = vsel %vm70, %v1280, 0
  %1294 = vmatprep.subr.mxu0 0.0
  %1295 = vmatpush1.msra.mxu0 %v1276
  %1296 = vmatprep.subr.mxu0 0.0
  %1297 = vmatpush1.msra.mxu0 %v1277
  %1298 = vmatprep.subr.mxu0 0.0
  %1299 = vmatpush1.msra.mxu0 %v1278
  %1300 = vmatprep.subr.mxu0 0.0
  %1301 = vmatpush1.msra.mxu0 %v1279
  %1302 = vmatprep.subr.mxu0 0.0
  %1303 = vmatpush1.msra.mxu0 0.0
  %1304 = vmatprep.subr.mxu0 0.0
  %1305 = vmatpush1.msra.mxu0 0.0
  %1306 = vmatprep.subr.mxu0 0.0
  %1307 = vmatpush1.msra.mxu0 0.0
  %1308 = vmatprep.subr.mxu0 0.0
  %1309 = vmatpush1.msra.mxu0 0.0
  %1310 = vmatprep.subr.mxu0 0.0
  %1311 = vmatpush1.msra.mxu0 0.0
  %1312 = vmatprep.subr.mxu0 0.0
  %1313 = vmatpush1.msra.mxu0 0.0
  %1314 = vmatprep.subr.mxu0 0.0
  %1315 = vmatpush1.msra.mxu0 0.0
  %1316 = vmatprep.subr.mxu0 0.0
  %1317 = vmatpush1.msra.mxu0 0.0
  %1318 = vmatprep.subr.mxu0 0.0
  %1319 = vmatpush1.msra.mxu0 0.0
  %1320 = vmatprep.subr.mxu0 0.0
  %1321 = vmatpush1.msra.mxu0 0.0
  %1322 = vmatprep.subr.mxu0 0.0
  %1323 = vmatpush1.msra.mxu0 0.0
  %1324 = vmatprep.subr.mxu0 0.0
  %1325 = vmatpush1.msra.mxu0 0.0
  %1326 = vmatprep.subr.mxu0 0.0
  %1327 = vmatpush1.msra.mxu0 0.0
  %1328 = vmatprep.subr.mxu0 0.0
  %1329 = vmatpush1.msra.mxu0 0.0
  %1330 = vmatprep.subr.mxu0 0.0
  %1331 = vmatpush1.msra.mxu0 0.0
  %1332 = vmatprep.subr.mxu0 0.0
  %1333 = vmatpush1.msra.mxu0 0.0
  %1334 = vmatprep.subr.mxu0 0.0
  %1335 = vmatpush1.msra.mxu0 0.0
  %1336 = vmatprep.subr.mxu0 0.0
  %1337 = vmatpush1.msra.mxu0 0.0
  %1338 = vmatprep.subr.mxu0 0.0
  %1339 = vmatpush1.msra.mxu0 0.0
  %1340 = vmatprep.subr.mxu0 0.0
  %1341 = vmatpush1.msra.mxu0 0.0
  %1342 = vmatprep.subr.mxu0 0.0
  %1343 = vmatpush1.msra.mxu0 0.0
  %1344 = vmatprep.subr.mxu0 0.0
  %1345 = vmatpush1.msra.mxu0 0.0
  %1346 = vmatprep.subr.mxu0 0.0
  %1347 = vmatpush1.msra.mxu0 0.0
  %1348 = vmatprep.subr.mxu0 0.0
  %1349 = vmatpush1.msra.mxu0 0.0
  %1350 = vmatprep.subr.mxu0 0.0
  %1351 = vmatpush1.msra.mxu0 0.0
  %1352 = vmatprep.subr.mxu0 0.0
  %1353 = vmatpush1.msra.mxu0 0.0
  %1354 = vmatprep.subr.mxu0 0.0
  %1355 = vmatpush1.msra.mxu0 0.0
  %1356 = vmatprep.subr.mxu0 0.0
  %1357 = vmatpush1.msra.mxu0 0.0
  %1358 = vmatprep.mubr.f32.mxu0 0.0
  %1359 = vmatmul.mubr.f32.gmra.mrb[0].mxu0 %v1292
  %v1360 = vpop.f32.mrb[0].mxu0
  %v1361 = vadd.f32 %v1290, %v1360
  %v1362 = vpop.f32.mrb[0].mxu0
  %1363 = vdwg.mxu0
  %v1364 = vsel %vm465, %v1361, 0.0
  %v1365 = vsub.f32 0.0, %v1364
  %v1366 = vmul.f32 %v1365, 1.442695
  %v1367 = vpow.pop %v1366
  %v1368 = vadd.f32 %v1367, 1.0
  %v1369 = vrcp.pop %v1368
  %1370 = vst [vmem:[%s17] sm:$0x1] %v1369
  // Predicated region
  $region70: #{ccc_generator_forward.1} parent=0 // pred_check
    _
  $region71: #{ccc_generator_forward.1} parent=0 // pred_check_branch
    %1372 = sbr.rel (0) target = $region73
  $region72: #{ccc_generator_forward.1} parent=0 // pred_region
    _
  $region73: #{ccc_generator_forward.1} parent=0 // pred_fallthru
    _
  // Predicated region
  $region74: #{ccc_generator_forward.1} parent=0 // pred_check
    _
  $region75: #{ccc_generator_forward.1} parent=0 // pred_check_branch
    %1374 = sbr.rel (0) target = $region77
  $region76: #{ccc_generator_forward.1} parent=0 // pred_region
    _
  $region77: #{ccc_generator_forward.1} parent=0 // pred_fallthru
    _

</llo_original>
